<compile_context>
chip_gen: v7x
topology: tpu7x:2x2x1
jax: 0.10.0
libtpu: 0.0.40
codegen_flags: <defaults>
</compile_context>

<pallas_src>
import functools
import math

import jax
import jax.numpy as jnp
from jax import lax
from jax.experimental import pallas as pl
from jax.experimental.pallas import tpu as pltpu


# ---------------------------------------------------------------------------
# helpers
# ---------------------------------------------------------------------------
def _row_tile(m):
    """Largest HBM/MXU-friendly row tile that divides m (falls back to full m)."""
    for t in (512, 256, 128, 64, 32, 16, 8):
        if m % t == 0:
            return t
    return m


def _layernorm_f32(z, gamma, beta, eps):
    """gamma * (z - mean) / (eps + std) + beta with torch.std semantics (N-1)."""
    n = z.shape[-1]
    mu = jnp.mean(z, axis=-1, keepdims=True)
    d = z - mu
    var = jnp.sum(d * d, axis=-1, keepdims=True) * (1.0 / float(n - 1))
    sigma = jnp.sqrt(var)
    return gamma * d / (eps + sigma) + beta


# ---------------------------------------------------------------------------
# kernels
# ---------------------------------------------------------------------------
def _linear_kernel(x_ref, w_ref, b_ref, o_ref):
    acc = jnp.dot(x_ref[...], w_ref[...], preferred_element_type=jnp.float32)
    o_ref[...] = (acc + b_ref[...]).astype(o_ref.dtype)


def _linear_residual_ln_kernel(x_ref, w_ref, b_ref, res_ref, g_ref, bt_ref,
                               o_ref, *, eps):
    acc = jnp.dot(x_ref[...], w_ref[...],
                  preferred_element_type=jnp.float32) + b_ref[...]
    z = res_ref[...].astype(jnp.float32) + acc                  # residual add
    o_ref[...] = _layernorm_f32(z, g_ref[...], bt_ref[...], eps).astype(o_ref.dtype)


def _ffn_residual_ln_kernel(x_ref, w1_ref, b1_ref, w2_ref, b2_ref, g_ref,
                            bt_ref, o_ref, *, eps):
    x = x_ref[...]
    h = jnp.dot(x, w1_ref[...], preferred_element_type=jnp.float32) + b1_ref[...]
    h = jnp.maximum(h, 0.0)                                      # ReLU
    y = jnp.dot(h.astype(x.dtype), w2_ref[...],
                preferred_element_type=jnp.float32) + b2_ref[...]
    z = x.astype(jnp.float32) + y                                # residual add
    o_ref[...] = _layernorm_f32(z, g_ref[...], bt_ref[...], eps).astype(o_ref.dtype)


def _attention_kernel(q_ref, k_ref, v_ref, mask_ref, o_ref, *, sm_scale):
    # Scale Q (Sq*dk elems) instead of scores (Sq*Sk elems): mathematically
    # identical, fewer VPU multiplies when Sk > dk.
    q = q_ref[...].astype(jnp.float32) * sm_scale                # (Sq, dk)
    k = k_ref[...]                                               # (Sk, dk)
    v = v_ref[...]                                               # (Sk, dk)
    # Q @ K^T without materializing a transpose (contract on dk).
    scores = lax.dot_general(q, k.astype(jnp.float32), (((1,), (1,)), ((), ())),
                             preferred_element_type=jnp.float32)
    scores = jnp.where(mask_ref[...] == 0, -1e9, scores)         # masked_fill
    m = jnp.max(scores, axis=-1, keepdims=True)
    p = jnp.exp(scores - m)                                      # EUP
    probs = p / jnp.sum(p, axis=-1, keepdims=True)
    o_ref[...] = jnp.dot(probs.astype(v.dtype), v,
                         preferred_element_type=jnp.float32).astype(o_ref.dtype)


# ---------------------------------------------------------------------------
# pallas_call wrappers
# ---------------------------------------------------------------------------
def _pallas_linear(x2, w, b):
    M, K = x2.shape
    N = w.shape[1]
    tm = _row_tile(M)
    return pl.pallas_call(
        _linear_kernel,
        out_shape=jax.ShapeDtypeStruct((M, N), x2.dtype),
        grid_spec=pltpu.PrefetchScalarGridSpec(
            num_scalar_prefetch=0,
            grid=(M // tm,),
            in_specs=[
                pl.BlockSpec((tm, K), lambda i: (i, 0)),
                pl.BlockSpec((K, N), lambda i: (0, 0)),
                pl.BlockSpec((1, N), lambda i: (0, 0)),
            ],
            out_specs=pl.BlockSpec((tm, N), lambda i: (i, 0)),
        ),
        compiler_params=pltpu.CompilerParams(dimension_semantics=("parallel",)),
    )(x2, w, b)


def _pallas_linear_residual_ln(x2, w, b, res2, gamma, beta, eps):
    M, K = x2.shape
    N = w.shape[1]
    tm = _row_tile(M)
    kernel = functools.partial(_linear_residual_ln_kernel, eps=eps)
    return pl.pallas_call(
        kernel,
        out_shape=jax.ShapeDtypeStruct((M, N), x2.dtype),
        grid_spec=pltpu.PrefetchScalarGridSpec(
            num_scalar_prefetch=0,
            grid=(M // tm,),
            in_specs=[
                pl.BlockSpec((tm, K), lambda i: (i, 0)),
                pl.BlockSpec((K, N), lambda i: (0, 0)),
                pl.BlockSpec((1, N), lambda i: (0, 0)),
                pl.BlockSpec((tm, N), lambda i: (i, 0)),
                pl.BlockSpec((1, 1), lambda i: (0, 0)),
                pl.BlockSpec((1, 1), lambda i: (0, 0)),
            ],
            out_specs=pl.BlockSpec((tm, N), lambda i: (i, 0)),
        ),
        compiler_params=pltpu.CompilerParams(dimension_semantics=("parallel",)),
    )(x2, w, b, res2, gamma, beta)


def _pallas_ffn_residual_ln(x2, w1, b1, w2, b2, gamma, beta, eps):
    M, D = x2.shape
    F = w1.shape[1]
    tm = _row_tile(M)
    kernel = functools.partial(_ffn_residual_ln_kernel, eps=eps)
    return pl.pallas_call(
        kernel,
        out_shape=jax.ShapeDtypeStruct((M, D), x2.dtype),
        grid_spec=pltpu.PrefetchScalarGridSpec(
            num_scalar_prefetch=0,
            grid=(M // tm,),
            in_specs=[
                pl.BlockSpec((tm, D), lambda i: (i, 0)),
                pl.BlockSpec((D, F), lambda i: (0, 0)),
                pl.BlockSpec((1, F), lambda i: (0, 0)),
                pl.BlockSpec((F, D), lambda i: (0, 0)),
                pl.BlockSpec((1, D), lambda i: (0, 0)),
                pl.BlockSpec((1, 1), lambda i: (0, 0)),
                pl.BlockSpec((1, 1), lambda i: (0, 0)),
            ],
            out_specs=pl.BlockSpec((tm, D), lambda i: (i, 0)),
        ),
        compiler_params=pltpu.CompilerParams(dimension_semantics=("parallel",)),
    )(x2, w1, b1, w2, b2, gamma, beta)


def _pallas_attention(q4, k4, v4, mask):
    """q4/k4/v4: (B, H, S, dk); mask: (B, 1, Sq, Sk) int32 (0 = masked)."""
    B, H, Sq, dk = q4.shape
    Sk = k4.shape[2]
    sm_scale = 1.0 / math.sqrt(dk)
    kernel = functools.partial(_attention_kernel, sm_scale=sm_scale)
    return pl.pallas_call(
        kernel,
        out_shape=jax.ShapeDtypeStruct((B, H, Sq, dk), q4.dtype),
        grid_spec=pltpu.PrefetchScalarGridSpec(
            num_scalar_prefetch=0,
            grid=(B, H),
            in_specs=[
                pl.BlockSpec((None, None, Sq, dk), lambda b, h: (b, h, 0, 0)),
                pl.BlockSpec((None, None, Sk, dk), lambda b, h: (b, h, 0, 0)),
                pl.BlockSpec((None, None, Sk, dk), lambda b, h: (b, h, 0, 0)),
                # mask block index is constant over h -> DMA'd once per batch
                pl.BlockSpec((None, None, Sq, Sk), lambda b, h: (b, 0, 0, 0)),
            ],
            out_specs=pl.BlockSpec((None, None, Sq, dk), lambda b, h: (b, h, 0, 0)),
        ),
        compiler_params=pltpu.CompilerParams(
            dimension_semantics=("parallel", "parallel")),
    )(q4, k4, v4, mask)


# ---------------------------------------------------------------------------
# DecoderBlock forward (Pallas pipeline)
# ---------------------------------------------------------------------------
@functools.partial(jax.jit, static_argnames=("num_head", "eps"))
def decoder_block_forward(x, encoder_output, src_mask, tgt_mask, params, *,
                          num_head, eps=1e-6):
    B, St, d_model = x.shape
    Ss = encoder_output.shape[1]
    dk = d_model // num_head

    x2 = x.reshape(B * St, d_model)
    enc2 = encoder_output.reshape(B * Ss, d_model)
    tgt_m = jnp.broadcast_to(tgt_mask, (B, 1, St, St)).astype(jnp.int32)
    src_m = jnp.broadcast_to(src_mask, (B, 1, St, Ss)).astype(jnp.int32)

    def split_heads(t2, batch, seq):
        return t2.reshape(batch, seq, num_head, dk).transpose(0, 2, 1, 3)

    def combine_heads(t4):
        b, h, s, d = t4.shape
        return t4.transpose(0, 2, 1, 3).reshape(b * s, h * d)

    # ---- sub-layer 1: masked self-attention + residual + LayerNorm ---------
    qkv = _pallas_linear(x2, params["self_w_qkv"], params["self_b_qkv"])
    q, k, v = jnp.split(qkv, 3, axis=-1)
    attn = _pallas_attention(split_heads(q, B, St), split_heads(k, B, St),
                             split_heads(v, B, St), tgt_m)
    x2 = _pallas_linear_residual_ln(combine_heads(attn), params["self_w_o"],
                                    params["self_b_o"], x2,
                                    params["ln0_gamma"], params["ln0_beta"], eps)

    # ---- sub-layer 2: cross-attention + residual + LayerNorm ---------------
    q = _pallas_linear(x2, params["cross_w_q"], params["cross_b_q"])
    kv = _pallas_linear(enc2, params["cross_w_kv"], params["cross_b_kv"])
    k, v = jnp.split(kv, 2, axis=-1)
    attn = _pallas_attention(split_heads(q, B, St), split_heads(k, B, Ss),
                             split_heads(v, B, Ss), src_m)
    x2 = _pallas_linear_residual_ln(combine_heads(attn), params["cross_w_o"],
                                    params["cross_b_o"], x2,
                                    params["ln1_gamma"], params["ln1_beta"], eps)

    # ---- sub-layer 3: feed-forward + residual + LayerNorm -------------------
    x2 = _pallas_ffn_residual_ln(x2, params["ffn_w1"], params["ffn_b1"],
                                 params["ffn_w2"], params["ffn_b2"],
                                 params["ln2_gamma"], params["ln2_beta"], eps)

    return x2.reshape(B, St, d_model)


# ---------------------------------------------------------------------------
# parameter init (PyTorch nn.Linear layout) + one-time kernel-layout prep
# ---------------------------------------------------------------------------
def init_raw_params(key, d_model, d_ff):
    def linear(k, fan_in, fan_out):
        kw, kb = jax.random.split(k)
        bound = 1.0 / math.sqrt(fan_in)
        w = jax.random.uniform(kw, (fan_out, fan_in), jnp.float32, -bound, bound)
        b = jax.random.uniform(kb, (fan_out,), jnp.float32, -bound, bound)
        return w, b

    keys = jax.random.split(key, 10)
    raw = {}
    raw["self_wq"], raw["self_bq"] = linear(keys[0], d_model, d_model)
    raw["self_wk"], raw["self_bk"] = linear(keys[1], d_model, d_model)
    raw["self_wv"], raw["self_bv"] = linear(keys[2], d_model, d_model)
    raw["self_wo"], raw["self_bo"] = linear(keys[3], d_model, d_model)
    raw["cross_wq"], raw["cross_bq"] = linear(keys[4], d_model, d_model)
    raw["cross_wk"], raw["cross_bk"] = linear(keys[5], d_model, d_model)
    raw["cross_wv"], raw["cross_bv"] = linear(keys[6], d_model, d_model)
    raw["cross_wo"], raw["cross_bo"] = linear(keys[7], d_model, d_model)
    raw["ffn_w1"], raw["ffn_b1"] = linear(keys[8], d_model, d_ff)
    raw["ffn_w2"], raw["ffn_b2"] = linear(keys[9], d_ff, d_model)
    for i in range(3):                       # LayerNormalization: gamma=1, beta=0
        raw[f"ln{i}_gamma"] = jnp.ones((), jnp.float32)
        raw[f"ln{i}_beta"] = jnp.zeros((), jnp.float32)
    return raw


def prep_kernel_params(raw):
    """One-time layout prep OUTSIDE the jitted hot path: transpose (out,in) ->
    (in,out), pack Q/K/V (and cross K/V), reshape biases/LN scalars to f32."""
    f32 = jnp.float32
    p = {}
    p["self_w_qkv"] = jnp.concatenate(
        [raw["self_wq"].T, raw["self_wk"].T, raw["self_wv"].T], axis=1)
    p["self_b_qkv"] = jnp.concatenate(
        [raw["self_bq"], raw["self_bk"], raw["self_bv"]]).reshape(1, -1).astype(f32)
    p["self_w_o"] = raw["self_wo"].T
    p["self_b_o"] = raw["self_bo"].reshape(1, -1).astype(f32)
    p["cross_w_q"] = raw["cross_wq"].T
    p["cross_b_q"] = raw["cross_bq"].reshape(1, -1).astype(f32)
    p["cross_w_kv"] = jnp.concatenate([raw["cross_wk"].T, raw["cross_wv"].T], axis=1)
    p["cross_b_kv"] = jnp.concatenate(
        [raw["cross_bk"], raw["cross_bv"]]).reshape(1, -1).astype(f32)
    p["cross_w_o"] = raw["cross_wo"].T
    p["cross_b_o"] = raw["cross_bo"].reshape(1, -1).astype(f32)
    p["ffn_w1"] = raw["ffn_w1"].T
    p["ffn_b1"] = raw["ffn_b1"].reshape(1, -1).astype(f32)
    p["ffn_w2"] = raw["ffn_w2"].T
    p["ffn_b2"] = raw["ffn_b2"].reshape(1, -1).astype(f32)
    for i in range(3):
        p[f"ln{i}_gamma"] = raw[f"ln{i}_gamma"].reshape(1, 1).astype(f32)
        p[f"ln{i}_beta"] = raw[f"ln{i}_beta"].reshape(1, 1).astype(f32)
    return p


# ---------------------------------------------------------------------------
# pure-JAX reference (mirrors the PyTorch module, eval mode)
# ---------------------------------------------------------------------------
def _ref_layernorm(z, gamma, beta, eps=1e-6):
    mu = jnp.mean(z, axis=-1, keepdims=True)
    sigma = jnp.std(z, axis=-1, keepdims=True, ddof=1)   # torch.std (unbiased)
    return gamma * (z - mu) / (eps + sigma) + beta


def _ref_mha(xq, xkv, mask, wq, bq, wk, bk, wv, bv, wo, bo, num_head):
    B, Sq, d_model = xq.shape
    Sk = xkv.shape[1]
    dk = d_model // num_head
    q = (xq @ wq.T + bq).reshape(B, Sq, num_head, dk).transpose(0, 2, 1, 3)
    k = (xkv @ wk.T + bk).reshape(B, Sk, num_head, dk).transpose(0, 2, 1, 3)
    v = (xkv @ wv.T + bv).reshape(B, Sk, num_head, dk).transpose(0, 2, 1, 3)
    scores = jnp.einsum("bhqd,bhkd->bhqk", q, k) / math.sqrt(dk)
    scores = jnp.where(mask == 0, -1e9, scores)
    probs = jax.nn.softmax(scores, axis=-1)
    out = jnp.einsum("bhqk,bhkd->bhqd", probs, v)
    out = out.transpose(0, 2, 1, 3).reshape(B, Sq, d_model)
    return out @ wo.T + bo


def ref_decoder_block(x, enc, src_mask, tgt_mask, raw, num_head, eps=1e-6):
    sa = _ref_mha(x, x, tgt_mask,
                  raw["self_wq"], raw["self_bq"], raw["self_wk"], raw["self_bk"],
                  raw["self_wv"], raw["self_bv"], raw["self_wo"], raw["self_bo"],
                  num_head)
    x = _ref_layernorm(x + sa, raw["ln0_gamma"], raw["ln0_beta"], eps)
    ca = _ref_mha(x, enc, src_mask,
                  raw["cross_wq"], raw["cross_bq"], raw["cross_wk"], raw["cross_bk"],
                  raw["cross_wv"], raw["cross_bv"], raw["cross_wo"], raw["cross_bo"],
                  num_head)
    x = _ref_layernorm(x + ca, raw["ln1_gamma"], raw["ln1_beta"], eps)
    h = jnp.maximum(x @ raw["ffn_w1"].T + raw["ffn_b1"], 0.0)
    ff = h @ raw["ffn_w2"].T + raw["ffn_b2"]
    x = _ref_layernorm(x + ff, raw["ln2_gamma"], raw["ln2_beta"], eps)
    return x


# ---------------------------------------------------------------------------
if __name__ == "__main__":
    batch, seq_tgt, seq_src = 2, 8, 8
    d_model, num_head, d_ff = 32, 4, 64

    key = jax.random.PRNGKey(0)
    k_param, k_x, k_enc = jax.random.split(key, 3)

    raw = init_raw_params(k_param, d_model, d_ff)
    params = prep_kernel_params(raw)   # one-time layout prep, outside jit

    x = jax.random.normal(k_x, (batch, seq_tgt, d_model), jnp.float32)
    enc = jax.random.normal(k_enc, (batch, seq_src, d_model), jnp.float32)

    # Causal target mask; padding-style source mask (batch 1 pads last 2 tokens).
    tgt_mask = jnp.tril(jnp.ones((seq_tgt, seq_tgt), jnp.int32))[None, None]
    src_valid = jnp.array([[1] * seq_src,
                           [1] * (seq_src - 2) + [0, 0]], jnp.int32)
    src_mask = src_valid[:, None, None, :]

    out = decoder_block_forward(x, enc, src_mask, tgt_mask, params,
                                num_head=num_head)
    out = jax.block_until_ready(out)

    ref = ref_decoder_block(x, enc, src_mask, tgt_mask, raw, num_head)
    assert out.shape == (batch, seq_tgt, d_model)
    max_err = float(jnp.max(jnp.abs(out - ref)))
    assert jnp.allclose(out, ref, atol=5e-4, rtol=5e-4), f"max_err={max_err}"

    print("KERNEL_OK")
</pallas_src>

<mosaic_0001>
module attributes {stable_mosaic.version = 11 : i64} {
  func.func @_linear_kernel(%arg0: i32, %arg1: memref<16x32xf32, #tpu.memory_space<vmem>>, %arg2: memref<32x96xf32, #tpu.memory_space<vmem>>, %arg3: memref<1x96xf32, #tpu.memory_space<vmem>>, %arg4: memref<16x96xf32, #tpu.memory_space<vmem>>) attributes {dimension_semantics = [#tpu.dimension_semantics<parallel>], iteration_bounds = array<i64: 1>, scalar_prefetch = 0 : i64, scratch_operands = 0 : i64, tpu.core_type = #tpu.core_type<tc>, window_params = [{transform_indices = @transform_0, window_bounds = array<i64: 16, 32>}, {pipeline_mode = #tpu.pipeline_mode<synchronous>, transform_indices = @transform_1, window_bounds = array<i64: 32, 96>}, {pipeline_mode = #tpu.pipeline_mode<synchronous>, transform_indices = @transform_2, window_bounds = array<i64: 1, 96>}, {transform_indices = @transform_3, window_bounds = array<i64: 16, 96>}]} {
    %c0 = arith.constant 0 : index
    %c0_0 = arith.constant 0 : index
    %0 = vector.load %arg1[%c0, %c0_0] : memref<16x32xf32, #tpu.memory_space<vmem>>, vector<16x32xf32>
    %c0_1 = arith.constant 0 : index
    %c0_2 = arith.constant 0 : index
    %1 = vector.load %arg2[%c0_1, %c0_2] : memref<32x96xf32, #tpu.memory_space<vmem>>, vector<32x96xf32>
    %cst = arith.constant dense<0.000000e+00> : vector<16x96xf32>
    %2 = tpu.matmul %0, %1, %cst {dimension_numbers = #tpu.dot_dimension_numbers<[1], [0], [0], [1], [0, 0, 1, 1], [], []>} : vector<16x32xf32>, vector<32x96xf32>, vector<16x96xf32> -> vector<16x96xf32>
    %c0_3 = arith.constant 0 : index
    %c0_4 = arith.constant 0 : index
    %3 = vector.load %arg3[%c0_3, %c0_4] : memref<1x96xf32, #tpu.memory_space<vmem>>, vector<1x96xf32>
    %4 = vector.broadcast %3 : vector<1x96xf32> to vector<16x96xf32>
    %5 = arith.addf %2, %4 : vector<16x96xf32>
    %c0_5 = arith.constant 0 : index
    %c0_6 = arith.constant 0 : index
    %6 = vector.load %arg4[%c0_5, %c0_6] : memref<16x96xf32, #tpu.memory_space<vmem>>, vector<16x96xf32>
    tpu.vector_store %arg4[%c0_5, %c0_6], %5 {strides = array<i32>} : memref<16x96xf32, #tpu.memory_space<vmem>>, vector<16x96xf32>,
    return
  }
  func.func @transform_0(%arg0: i32) -> (i32, i32) {
    %c0_i32 = arith.constant 0 : i32
    %c0_i32_0 = arith.constant 0 : i32
    return %arg0, %c0_i32 : i32, i32
  }
  func.func @transform_1(%arg0: i32) -> (i32, i32) {
    %c0_i32 = arith.constant 0 : i32
    %c0_i32_0 = arith.constant 0 : i32
    %c0_i32_1 = arith.constant 0 : i32
    return %c0_i32, %c0_i32_0 : i32, i32
  }
  func.func @transform_2(%arg0: i32) -> (i32, i32) {
    %c0_i32 = arith.constant 0 : i32
    %c0_i32_0 = arith.constant 0 : i32
    %c0_i32_1 = arith.constant 0 : i32
    return %c0_i32, %c0_i32_0 : i32, i32
  }
  func.func @transform_3(%arg0: i32) -> (i32, i32) {
    %c0_i32 = arith.constant 0 : i32
    %c0_i32_0 = arith.constant 0 : i32
    return %arg0, %c0_i32 : i32, i32
  }
}

module attributes {stable_mosaic.version = 11 : i64} {
  func.func @_attention_kernel(%arg0: i32, %arg1: i32, %arg2: memref<1x1x8x8xf32, #tpu.memory_space<vmem>>, %arg3: memref<1x1x8x8xf32, #tpu.memory_space<vmem>>, %arg4: memref<1x1x8x8xf32, #tpu.memory_space<vmem>>, %arg5: memref<1x1x8x8xi32, #tpu.memory_space<vmem>>, %arg6: memref<1x1x8x8xf32, #tpu.memory_space<vmem>>) attributes {dimension_semantics = [#tpu.dimension_semantics<parallel>, #tpu.dimension_semantics<parallel>], iteration_bounds = array<i64: 2, 4>, scalar_prefetch = 0 : i64, scratch_operands = 0 : i64, tpu.core_type = #tpu.core_type<tc>, window_params = [{transform_indices = @transform_0, window_bounds = array<i64: 1, 1, 8, 8>}, {transform_indices = @transform_1, window_bounds = array<i64: 1, 1, 8, 8>}, {transform_indices = @transform_2, window_bounds = array<i64: 1, 1, 8, 8>}, {transform_indices = @transform_3, window_bounds = array<i64: 1, 1, 8, 8>}, {transform_indices = @transform_4, window_bounds = array<i64: 1, 1, 8, 8>}]} {
    %c0 = arith.constant 0 : index
    %c0_0 = arith.constant 0 : index
    %c0_1 = arith.constant 0 : index
    %c0_2 = arith.constant 0 : index
    %0 = vector.load %arg2[%c0, %c0_0, %c0_1, %c0_2] : memref<1x1x8x8xf32, #tpu.memory_space<vmem>>, vector<1x1x8x8xf32>
    %1 = vector.shape_cast %0 : vector<1x1x8x8xf32> to vector<8x8xf32>
    %cst = arith.constant 0.353553385 : f32
    %2 = vector.broadcast %cst : f32 to vector<8x8xf32>
    %3 = arith.mulf %1, %2 : vector<8x8xf32>
    %c0_3 = arith.constant 0 : index
    %c0_4 = arith.constant 0 : index
    %c0_5 = arith.constant 0 : index
    %c0_6 = arith.constant 0 : index
    %4 = vector.load %arg3[%c0_3, %c0_4, %c0_5, %c0_6] : memref<1x1x8x8xf32, #tpu.memory_space<vmem>>, vector<1x1x8x8xf32>
    %5 = vector.shape_cast %4 : vector<1x1x8x8xf32> to vector<8x8xf32>
    %c0_7 = arith.constant 0 : index
    %c0_8 = arith.constant 0 : index
    %c0_9 = arith.constant 0 : index
    %c0_10 = arith.constant 0 : index
    %6 = vector.load %arg4[%c0_7, %c0_8, %c0_9, %c0_10] : memref<1x1x8x8xf32, #tpu.memory_space<vmem>>, vector<1x1x8x8xf32>
    %7 = vector.shape_cast %6 : vector<1x1x8x8xf32> to vector<8x8xf32>
    %cst_11 = arith.constant dense<0.000000e+00> : vector<8x8xf32>
    %8 = tpu.matmul %3, %5, %cst_11 {dimension_numbers = #tpu.dot_dimension_numbers<[1], [1], [0], [0], [0, 0, 1, 0], [], []>} : vector<8x8xf32>, vector<8x8xf32>, vector<8x8xf32> -> vector<8x8xf32>
    %c0_12 = arith.constant 0 : index
    %c0_13 = arith.constant 0 : index
    %c0_14 = arith.constant 0 : index
    %c0_15 = arith.constant 0 : index
    %9 = vector.load %arg5[%c0_12, %c0_13, %c0_14, %c0_15] : memref<1x1x8x8xi32, #tpu.memory_space<vmem>>, vector<1x1x8x8xi32>
    %10 = vector.shape_cast %9 : vector<1x1x8x8xi32> to vector<8x8xi32>
    %c0_i32 = arith.constant 0 : i32
    %11 = vector.broadcast %c0_i32 : i32 to vector<8x8xi32>
    %12 = arith.cmpi eq, %10, %11 : vector<8x8xi32>
    %cst_16 = arith.constant -1.000000e+09 : f32
    %13 = vector.broadcast %cst_16 : f32 to vector<8x8xf32>
    %14 = arith.select %12, %13, %8 : vector<8x8xi1>, vector<8x8xf32>
    %cst_17 = arith.constant dense<0xFF800000> : vector<8xf32>
    %15 = vector.multi_reduction <maximumf>, %14, %cst_17 [1] : vector<8x8xf32> to vector<8xf32>
    %16 = vector.shape_cast %15 : vector<8xf32> to vector<8x1xf32>
    %17 = vector.broadcast %16 : vector<8x1xf32> to vector<8x8xf32>
    %18 = arith.subf %14, %17 : vector<8x8xf32>
    %19 = math.exp %18 : vector<8x8xf32>
    %cst_18 = arith.constant dense<0.000000e+00> : vector<8xf32>
    %20 = vector.multi_reduction <add>, %19, %cst_18 [1] : vector<8x8xf32> to vector<8xf32>
    %21 = vector.shape_cast %20 : vector<8xf32> to vector<8x1xf32>
    %22 = vector.broadcast %21 : vector<8x1xf32> to vector<8x8xf32>
    %23 = arith.divf %19, %22 : vector<8x8xf32>
    %cst_19 = arith.constant dense<0.000000e+00> : vector<8x8xf32>
    %24 = tpu.matmul %23, %7, %cst_19 {dimension_numbers = #tpu.dot_dimension_numbers<[1], [0], [0], [1], [0, 0, 1, 1], [], []>} : vector<8x8xf32>, vector<8x8xf32>, vector<8x8xf32> -> vector<8x8xf32>
    %c0_20 = arith.constant 0 : index
    %c0_21 = arith.constant 0 : index
    %c0_22 = arith.constant 0 : index
    %c0_23 = arith.constant 0 : index
    %25 = vector.load %arg6[%c0_20, %c0_21, %c0_22, %c0_23] : memref<1x1x8x8xf32, #tpu.memory_space<vmem>>, vector<1x1x8x8xf32>
    %26 = vector.shape_cast %25 : vector<1x1x8x8xf32> to vector<8x8xf32>
    %27 = vector.shape_cast %24 : vector<8x8xf32> to vector<1x1x8x8xf32>
    tpu.vector_store %arg6[%c0_20, %c0_21, %c0_22, %c0_23], %27 {strides = array<i32>} : memref<1x1x8x8xf32, #tpu.memory_space<vmem>>, vector<1x1x8x8xf32>,
    return
  }
  func.func @transform_0(%arg0: i32, %arg1: i32) -> (i32, i32, i32, i32) {
    %c0_i32 = arith.constant 0 : i32
    %c0_i32_0 = arith.constant 0 : i32
    %c0_i32_1 = arith.constant 0 : i32
    return %arg0, %arg1, %c0_i32, %c0_i32_0 : i32, i32, i32, i32
  }
  func.func @transform_1(%arg0: i32, %arg1: i32) -> (i32, i32, i32, i32) {
    %c0_i32 = arith.constant 0 : i32
    %c0_i32_0 = arith.constant 0 : i32
    %c0_i32_1 = arith.constant 0 : i32
    return %arg0, %arg1, %c0_i32, %c0_i32_0 : i32, i32, i32, i32
  }
  func.func @transform_2(%arg0: i32, %arg1: i32) -> (i32, i32, i32, i32) {
    %c0_i32 = arith.constant 0 : i32
    %c0_i32_0 = arith.constant 0 : i32
    %c0_i32_1 = arith.constant 0 : i32
    return %arg0, %arg1, %c0_i32, %c0_i32_0 : i32, i32, i32, i32
  }
  func.func @transform_3(%arg0: i32, %arg1: i32) -> (i32, i32, i32, i32) {
    %c0_i32 = arith.constant 0 : i32
    %c0_i32_0 = arith.constant 0 : i32
    %c0_i32_1 = arith.constant 0 : i32
    %c0_i32_2 = arith.constant 0 : i32
    return %arg0, %c0_i32, %c0_i32_0, %c0_i32_1 : i32, i32, i32, i32
  }
  func.func @transform_4(%arg0: i32, %arg1: i32) -> (i32, i32, i32, i32) {
    %c0_i32 = arith.constant 0 : i32
    %c0_i32_0 = arith.constant 0 : i32
    %c0_i32_1 = arith.constant 0 : i32
    return %arg0, %arg1, %c0_i32, %c0_i32_0 : i32, i32, i32, i32
  }
}

module attributes {stable_mosaic.version = 11 : i64} {
  func.func @_linear_residual_ln_kernel(%arg0: i32, %arg1: memref<16x32xf32, #tpu.memory_space<vmem>>, %arg2: memref<32x32xf32, #tpu.memory_space<vmem>>, %arg3: memref<1x32xf32, #tpu.memory_space<vmem>>, %arg4: memref<16x32xf32, #tpu.memory_space<vmem>>, %arg5: memref<1x1xf32, #tpu.memory_space<vmem>>, %arg6: memref<1x1xf32, #tpu.memory_space<vmem>>, %arg7: memref<16x32xf32, #tpu.memory_space<vmem>>) attributes {dimension_semantics = [#tpu.dimension_semantics<parallel>], iteration_bounds = array<i64: 1>, scalar_prefetch = 0 : i64, scratch_operands = 0 : i64, tpu.core_type = #tpu.core_type<tc>, window_params = [{transform_indices = @transform_0, window_bounds = array<i64: 16, 32>}, {pipeline_mode = #tpu.pipeline_mode<synchronous>, transform_indices = @transform_1, window_bounds = array<i64: 32, 32>}, {pipeline_mode = #tpu.pipeline_mode<synchronous>, transform_indices = @transform_2, window_bounds = array<i64: 1, 32>}, {transform_indices = @transform_3, window_bounds = array<i64: 16, 32>}, {pipeline_mode = #tpu.pipeline_mode<synchronous>, transform_indices = @transform_4, window_bounds = array<i64: 1, 1>}, {pipeline_mode = #tpu.pipeline_mode<synchronous>, transform_indices = @transform_5, window_bounds = array<i64: 1, 1>}, {transform_indices = @transform_6, window_bounds = array<i64: 16, 32>}]} {
    %c0 = arith.constant 0 : index
    %c0_0 = arith.constant 0 : index
    %0 = vector.load %arg1[%c0, %c0_0] : memref<16x32xf32, #tpu.memory_space<vmem>>, vector<16x32xf32>
    %c0_1 = arith.constant 0 : index
    %c0_2 = arith.constant 0 : index
    %1 = vector.load %arg2[%c0_1, %c0_2] : memref<32x32xf32, #tpu.memory_space<vmem>>, vector<32x32xf32>
    %cst = arith.constant dense<0.000000e+00> : vector<16x32xf32>
    %2 = tpu.matmul %0, %1, %cst {dimension_numbers = #tpu.dot_dimension_numbers<[1], [0], [0], [1], [0, 0, 1, 1], [], []>} : vector<16x32xf32>, vector<32x32xf32>, vector<16x32xf32> -> vector<16x32xf32>
    %c0_3 = arith.constant 0 : index
    %c0_4 = arith.constant 0 : index
    %3 = vector.load %arg3[%c0_3, %c0_4] : memref<1x32xf32, #tpu.memory_space<vmem>>, vector<1x32xf32>
    %4 = vector.broadcast %3 : vector<1x32xf32> to vector<16x32xf32>
    %5 = arith.addf %2, %4 : vector<16x32xf32>
    %c0_5 = arith.constant 0 : index
    %c0_6 = arith.constant 0 : index
    %6 = vector.load %arg4[%c0_5, %c0_6] : memref<16x32xf32, #tpu.memory_space<vmem>>, vector<16x32xf32>
    %7 = arith.addf %6, %5 : vector<16x32xf32>
    %c0_7 = arith.constant 0 : index
    %c0_8 = arith.constant 0 : index
    %8 = vector.load %arg5[%c0_7, %c0_8] : memref<1x1xf32, #tpu.memory_space<vmem>>, vector<1x1xf32>
    %c0_9 = arith.constant 0 : index
    %c0_10 = arith.constant 0 : index
    %9 = vector.load %arg6[%c0_9, %c0_10] : memref<1x1xf32, #tpu.memory_space<vmem>>, vector<1x1xf32>
    %cst_11 = arith.constant dense<0.000000e+00> : vector<16xf32>
    %10 = vector.multi_reduction <add>, %7, %cst_11 [1] : vector<16x32xf32> to vector<16xf32>
    %11 = vector.shape_cast %10 : vector<16xf32> to vector<16x1xf32>
    %cst_12 = arith.constant 3.200000e+01 : f32
    %12 = vector.broadcast %cst_12 : f32 to vector<16x1xf32>
    %13 = arith.divf %11, %12 : vector<16x1xf32>
    %14 = vector.broadcast %13 : vector<16x1xf32> to vector<16x32xf32>
    %15 = arith.subf %7, %14 : vector<16x32xf32>
    %16 = arith.mulf %15, %15 : vector<16x32xf32>
    %cst_13 = arith.constant dense<0.000000e+00> : vector<16xf32>
    %17 = vector.multi_reduction <add>, %16, %cst_13 [1] : vector<16x32xf32> to vector<16xf32>
    %18 = vector.shape_cast %17 : vector<16xf32> to vector<16x1xf32>
    %cst_14 = arith.constant 0.0322580636 : f32
    %19 = vector.broadcast %cst_14 : f32 to vector<16x1xf32>
    %20 = arith.mulf %18, %19 : vector<16x1xf32>
    %21 = math.sqrt %20 : vector<16x1xf32>
    %22 = vector.broadcast %8 : vector<1x1xf32> to vector<16x32xf32>
    %23 = arith.mulf %22, %15 : vector<16x32xf32>
    %cst_15 = arith.constant 9.99999997E-7 : f32
    %24 = vector.broadcast %cst_15 : f32 to vector<16x1xf32>
    %25 = arith.addf %24, %21 : vector<16x1xf32>
    %26 = vector.broadcast %25 : vector<16x1xf32> to vector<16x32xf32>
    %27 = arith.divf %23, %26 : vector<16x32xf32>
    %28 = vector.broadcast %9 : vector<1x1xf32> to vector<16x32xf32>
    %29 = arith.addf %27, %28 : vector<16x32xf32>
    %c0_16 = arith.constant 0 : index
    %c0_17 = arith.constant 0 : index
    %30 = vector.load %arg7[%c0_16, %c0_17] : memref<16x32xf32, #tpu.memory_space<vmem>>, vector<16x32xf32>
    tpu.vector_store %arg7[%c0_16, %c0_17], %29 {strides = array<i32>} : memref<16x32xf32, #tpu.memory_space<vmem>>, vector<16x32xf32>,
    return
  }
  func.func @transform_0(%arg0: i32) -> (i32, i32) {
    %c0_i32 = arith.constant 0 : i32
    %c0_i32_0 = arith.constant 0 : i32
    return %arg0, %c0_i32 : i32, i32
  }
  func.func @transform_1(%arg0: i32) -> (i32, i32) {
    %c0_i32 = arith.constant 0 : i32
    %c0_i32_0 = arith.constant 0 : i32
    %c0_i32_1 = arith.constant 0 : i32
    return %c0_i32, %c0_i32_0 : i32, i32
  }
  func.func @transform_2(%arg0: i32) -> (i32, i32) {
    %c0_i32 = arith.constant 0 : i32
    %c0_i32_0 = arith.constant 0 : i32
    %c0_i32_1 = arith.constant 0 : i32
    return %c0_i32, %c0_i32_0 : i32, i32
  }
  func.func @transform_3(%arg0: i32) -> (i32, i32) {
    %c0_i32 = arith.constant 0 : i32
    %c0_i32_0 = arith.constant 0 : i32
    return %arg0, %c0_i32 : i32, i32
  }
  func.func @transform_4(%arg0: i32) -> (i32, i32) {
    %c0_i32 = arith.constant 0 : i32
    %c0_i32_0 = arith.constant 0 : i32
    %c0_i32_1 = arith.constant 0 : i32
    return %c0_i32, %c0_i32_0 : i32, i32
  }
  func.func @transform_5(%arg0: i32) -> (i32, i32) {
    %c0_i32 = arith.constant 0 : i32
    %c0_i32_0 = arith.constant 0 : i32
    %c0_i32_1 = arith.constant 0 : i32
    return %c0_i32, %c0_i32_0 : i32, i32
  }
  func.func @transform_6(%arg0: i32) -> (i32, i32) {
    %c0_i32 = arith.constant 0 : i32
    %c0_i32_0 = arith.constant 0 : i32
    return %arg0, %c0_i32 : i32, i32
  }
}

module attributes {stable_mosaic.version = 11 : i64} {
  func.func @_linear_kernel(%arg0: i32, %arg1: memref<16x32xf32, #tpu.memory_space<vmem>>, %arg2: memref<32x64xf32, #tpu.memory_space<vmem>>, %arg3: memref<1x64xf32, #tpu.memory_space<vmem>>, %arg4: memref<16x64xf32, #tpu.memory_space<vmem>>) attributes {dimension_semantics = [#tpu.dimension_semantics<parallel>], iteration_bounds = array<i64: 1>, scalar_prefetch = 0 : i64, scratch_operands = 0 : i64, tpu.core_type = #tpu.core_type<tc>, window_params = [{transform_indices = @transform_0, window_bounds = array<i64: 16, 32>}, {pipeline_mode = #tpu.pipeline_mode<synchronous>, transform_indices = @transform_1, window_bounds = array<i64: 32, 64>}, {pipeline_mode = #tpu.pipeline_mode<synchronous>, transform_indices = @transform_2, window_bounds = array<i64: 1, 64>}, {transform_indices = @transform_3, window_bounds = array<i64: 16, 64>}]} {
    %c0 = arith.constant 0 : index
    %c0_0 = arith.constant 0 : index
    %0 = vector.load %arg1[%c0, %c0_0] : memref<16x32xf32, #tpu.memory_space<vmem>>, vector<16x32xf32>
    %c0_1 = arith.constant 0 : index
    %c0_2 = arith.constant 0 : index
    %1 = vector.load %arg2[%c0_1, %c0_2] : memref<32x64xf32, #tpu.memory_space<vmem>>, vector<32x64xf32>
    %cst = arith.constant dense<0.000000e+00> : vector<16x64xf32>
    %2 = tpu.matmul %0, %1, %cst {dimension_numbers = #tpu.dot_dimension_numbers<[1], [0], [0], [1], [0, 0, 1, 1], [], []>} : vector<16x32xf32>, vector<32x64xf32>, vector<16x64xf32> -> vector<16x64xf32>
    %c0_3 = arith.constant 0 : index
    %c0_4 = arith.constant 0 : index
    %3 = vector.load %arg3[%c0_3, %c0_4] : memref<1x64xf32, #tpu.memory_space<vmem>>, vector<1x64xf32>
    %4 = vector.broadcast %3 : vector<1x64xf32> to vector<16x64xf32>
    %5 = arith.addf %2, %4 : vector<16x64xf32>
    %c0_5 = arith.constant 0 : index
    %c0_6 = arith.constant 0 : index
    %6 = vector.load %arg4[%c0_5, %c0_6] : memref<16x64xf32, #tpu.memory_space<vmem>>, vector<16x64xf32>
    tpu.vector_store %arg4[%c0_5, %c0_6], %5 {strides = array<i32>} : memref<16x64xf32, #tpu.memory_space<vmem>>, vector<16x64xf32>,
    return
  }
  func.func @transform_0(%arg0: i32) -> (i32, i32) {
    %c0_i32 = arith.constant 0 : i32
    %c0_i32_0 = arith.constant 0 : i32
    return %arg0, %c0_i32 : i32, i32
  }
  func.func @transform_1(%arg0: i32) -> (i32, i32) {
    %c0_i32 = arith.constant 0 : i32
    %c0_i32_0 = arith.constant 0 : i32
    %c0_i32_1 = arith.constant 0 : i32
    return %c0_i32, %c0_i32_0 : i32, i32
  }
  func.func @transform_2(%arg0: i32) -> (i32, i32) {
    %c0_i32 = arith.constant 0 : i32
    %c0_i32_0 = arith.constant 0 : i32
    %c0_i32_1 = arith.constant 0 : i32
    return %c0_i32, %c0_i32_0 : i32, i32
  }
  func.func @transform_3(%arg0: i32) -> (i32, i32) {
    %c0_i32 = arith.constant 0 : i32
    %c0_i32_0 = arith.constant 0 : i32
    return %arg0, %c0_i32 : i32, i32
  }
}

module attributes {stable_mosaic.version = 11 : i64} {
  func.func @_linear_kernel(%arg0: i32, %arg1: memref<16x32xf32, #tpu.memory_space<vmem>>, %arg2: memref<32x32xf32, #tpu.memory_space<vmem>>, %arg3: memref<1x32xf32, #tpu.memory_space<vmem>>, %arg4: memref<16x32xf32, #tpu.memory_space<vmem>>) attributes {dimension_semantics = [#tpu.dimension_semantics<parallel>], iteration_bounds = array<i64: 1>, scalar_prefetch = 0 : i64, scratch_operands = 0 : i64, tpu.core_type = #tpu.core_type<tc>, window_params = [{transform_indices = @transform_0, window_bounds = array<i64: 16, 32>}, {pipeline_mode = #tpu.pipeline_mode<synchronous>, transform_indices = @transform_1, window_bounds = array<i64: 32, 32>}, {pipeline_mode = #tpu.pipeline_mode<synchronous>, transform_indices = @transform_2, window_bounds = array<i64: 1, 32>}, {transform_indices = @transform_3, window_bounds = array<i64: 16, 32>}]} {
    %c0 = arith.constant 0 : index
    %c0_0 = arith.constant 0 : index
    %0 = vector.load %arg1[%c0, %c0_0] : memref<16x32xf32, #tpu.memory_space<vmem>>, vector<16x32xf32>
    %c0_1 = arith.constant 0 : index
    %c0_2 = arith.constant 0 : index
    %1 = vector.load %arg2[%c0_1, %c0_2] : memref<32x32xf32, #tpu.memory_space<vmem>>, vector<32x32xf32>
    %cst = arith.constant dense<0.000000e+00> : vector<16x32xf32>
    %2 = tpu.matmul %0, %1, %cst {dimension_numbers = #tpu.dot_dimension_numbers<[1], [0], [0], [1], [0, 0, 1, 1], [], []>} : vector<16x32xf32>, vector<32x32xf32>, vector<16x32xf32> -> vector<16x32xf32>
    %c0_3 = arith.constant 0 : index
    %c0_4 = arith.constant 0 : index
    %3 = vector.load %arg3[%c0_3, %c0_4] : memref<1x32xf32, #tpu.memory_space<vmem>>, vector<1x32xf32>
    %4 = vector.broadcast %3 : vector<1x32xf32> to vector<16x32xf32>
    %5 = arith.addf %2, %4 : vector<16x32xf32>
    %c0_5 = arith.constant 0 : index
    %c0_6 = arith.constant 0 : index
    %6 = vector.load %arg4[%c0_5, %c0_6] : memref<16x32xf32, #tpu.memory_space<vmem>>, vector<16x32xf32>
    tpu.vector_store %arg4[%c0_5, %c0_6], %5 {strides = array<i32>} : memref<16x32xf32, #tpu.memory_space<vmem>>, vector<16x32xf32>,
    return
  }
  func.func @transform_0(%arg0: i32) -> (i32, i32) {
    %c0_i32 = arith.constant 0 : i32
    %c0_i32_0 = arith.constant 0 : i32
    return %arg0, %c0_i32 : i32, i32
  }
  func.func @transform_1(%arg0: i32) -> (i32, i32) {
    %c0_i32 = arith.constant 0 : i32
    %c0_i32_0 = arith.constant 0 : i32
    %c0_i32_1 = arith.constant 0 : i32
    return %c0_i32, %c0_i32_0 : i32, i32
  }
  func.func @transform_2(%arg0: i32) -> (i32, i32) {
    %c0_i32 = arith.constant 0 : i32
    %c0_i32_0 = arith.constant 0 : i32
    %c0_i32_1 = arith.constant 0 : i32
    return %c0_i32, %c0_i32_0 : i32, i32
  }
  func.func @transform_3(%arg0: i32) -> (i32, i32) {
    %c0_i32 = arith.constant 0 : i32
    %c0_i32_0 = arith.constant 0 : i32
    return %arg0, %c0_i32 : i32, i32
  }
}

module attributes {stable_mosaic.version = 11 : i64} {
  func.func @_ffn_residual_ln_kernel(%arg0: i32, %arg1: memref<16x32xf32, #tpu.memory_space<vmem>>, %arg2: memref<32x64xf32, #tpu.memory_space<vmem>>, %arg3: memref<1x64xf32, #tpu.memory_space<vmem>>, %arg4: memref<64x32xf32, #tpu.memory_space<vmem>>, %arg5: memref<1x32xf32, #tpu.memory_space<vmem>>, %arg6: memref<1x1xf32, #tpu.memory_space<vmem>>, %arg7: memref<1x1xf32, #tpu.memory_space<vmem>>, %arg8: memref<16x32xf32, #tpu.memory_space<vmem>>) attributes {dimension_semantics = [#tpu.dimension_semantics<parallel>], iteration_bounds = array<i64: 1>, scalar_prefetch = 0 : i64, scratch_operands = 0 : i64, tpu.core_type = #tpu.core_type<tc>, window_params = [{transform_indices = @transform_0, window_bounds = array<i64: 16, 32>}, {pipeline_mode = #tpu.pipeline_mode<synchronous>, transform_indices = @transform_1, window_bounds = array<i64: 32, 64>}, {pipeline_mode = #tpu.pipeline_mode<synchronous>, transform_indices = @transform_2, window_bounds = array<i64: 1, 64>}, {pipeline_mode = #tpu.pipeline_mode<synchronous>, transform_indices = @transform_3, window_bounds = array<i64: 64, 32>}, {pipeline_mode = #tpu.pipeline_mode<synchronous>, transform_indices = @transform_4, window_bounds = array<i64: 1, 32>}, {pipeline_mode = #tpu.pipeline_mode<synchronous>, transform_indices = @transform_5, window_bounds = array<i64: 1, 1>}, {pipeline_mode = #tpu.pipeline_mode<synchronous>, transform_indices = @transform_6, window_bounds = array<i64: 1, 1>}, {transform_indices = @transform_7, window_bounds = array<i64: 16, 32>}]} {
    %c0 = arith.constant 0 : index
    %c0_0 = arith.constant 0 : index
    %0 = vector.load %arg1[%c0, %c0_0] : memref<16x32xf32, #tpu.memory_space<vmem>>, vector<16x32xf32>
    %c0_1 = arith.constant 0 : index
    %c0_2 = arith.constant 0 : index
    %1 = vector.load %arg2[%c0_1, %c0_2] : memref<32x64xf32, #tpu.memory_space<vmem>>, vector<32x64xf32>
    %cst = arith.constant dense<0.000000e+00> : vector<16x64xf32>
    %2 = tpu.matmul %0, %1, %cst {dimension_numbers = #tpu.dot_dimension_numbers<[1], [0], [0], [1], [0, 0, 1, 1], [], []>} : vector<16x32xf32>, vector<32x64xf32>, vector<16x64xf32> -> vector<16x64xf32>
    %c0_3 = arith.constant 0 : index
    %c0_4 = arith.constant 0 : index
    %3 = vector.load %arg3[%c0_3, %c0_4] : memref<1x64xf32, #tpu.memory_space<vmem>>, vector<1x64xf32>
    %4 = vector.broadcast %3 : vector<1x64xf32> to vector<16x64xf32>
    %5 = arith.addf %2, %4 : vector<16x64xf32>
    %cst_5 = arith.constant 0.000000e+00 : f32
    %6 = vector.broadcast %cst_5 : f32 to vector<16x64xf32>
    %7 = arith.maximumf %5, %6 : vector<16x64xf32>
    %c0_6 = arith.constant 0 : index
    %c0_7 = arith.constant 0 : index
    %8 = vector.load %arg4[%c0_6, %c0_7] : memref<64x32xf32, #tpu.memory_space<vmem>>, vector<64x32xf32>
    %cst_8 = arith.constant dense<0.000000e+00> : vector<16x32xf32>
    %9 = tpu.matmul %7, %8, %cst_8 {dimension_numbers = #tpu.dot_dimension_numbers<[1], [0], [0], [1], [0, 0, 1, 1], [], []>} : vector<16x64xf32>, vector<64x32xf32>, vector<16x32xf32> -> vector<16x32xf32>
    %c0_9 = arith.constant 0 : index
    %c0_10 = arith.constant 0 : index
    %10 = vector.load %arg5[%c0_9, %c0_10] : memref<1x32xf32, #tpu.memory_space<vmem>>, vector<1x32xf32>
    %11 = vector.broadcast %10 : vector<1x32xf32> to vector<16x32xf32>
    %12 = arith.addf %9, %11 : vector<16x32xf32>
    %13 = arith.addf %0, %12 : vector<16x32xf32>
    %c0_11 = arith.constant 0 : index
    %c0_12 = arith.constant 0 : index
    %14 = vector.load %arg6[%c0_11, %c0_12] : memref<1x1xf32, #tpu.memory_space<vmem>>, vector<1x1xf32>
    %c0_13 = arith.constant 0 : index
    %c0_14 = arith.constant 0 : index
    %15 = vector.load %arg7[%c0_13, %c0_14] : memref<1x1xf32, #tpu.memory_space<vmem>>, vector<1x1xf32>
    %cst_15 = arith.constant dense<0.000000e+00> : vector<16xf32>
    %16 = vector.multi_reduction <add>, %13, %cst_15 [1] : vector<16x32xf32> to vector<16xf32>
    %17 = vector.shape_cast %16 : vector<16xf32> to vector<16x1xf32>
    %cst_16 = arith.constant 3.200000e+01 : f32
    %18 = vector.broadcast %cst_16 : f32 to vector<16x1xf32>
    %19 = arith.divf %17, %18 : vector<16x1xf32>
    %20 = vector.broadcast %19 : vector<16x1xf32> to vector<16x32xf32>
    %21 = arith.subf %13, %20 : vector<16x32xf32>
    %22 = arith.mulf %21, %21 : vector<16x32xf32>
    %cst_17 = arith.constant dense<0.000000e+00> : vector<16xf32>
    %23 = vector.multi_reduction <add>, %22, %cst_17 [1] : vector<16x32xf32> to vector<16xf32>
    %24 = vector.shape_cast %23 : vector<16xf32> to vector<16x1xf32>
    %cst_18 = arith.constant 0.0322580636 : f32
    %25 = vector.broadcast %cst_18 : f32 to vector<16x1xf32>
    %26 = arith.mulf %24, %25 : vector<16x1xf32>
    %27 = math.sqrt %26 : vector<16x1xf32>
    %28 = vector.broadcast %14 : vector<1x1xf32> to vector<16x32xf32>
    %29 = arith.mulf %28, %21 : vector<16x32xf32>
    %cst_19 = arith.constant 9.99999997E-7 : f32
    %30 = vector.broadcast %cst_19 : f32 to vector<16x1xf32>
    %31 = arith.addf %30, %27 : vector<16x1xf32>
    %32 = vector.broadcast %31 : vector<16x1xf32> to vector<16x32xf32>
    %33 = arith.divf %29, %32 : vector<16x32xf32>
    %34 = vector.broadcast %15 : vector<1x1xf32> to vector<16x32xf32>
    %35 = arith.addf %33, %34 : vector<16x32xf32>
    %c0_20 = arith.constant 0 : index
    %c0_21 = arith.constant 0 : index
    %36 = vector.load %arg8[%c0_20, %c0_21] : memref<16x32xf32, #tpu.memory_space<vmem>>, vector<16x32xf32>
    tpu.vector_store %arg8[%c0_20, %c0_21], %35 {strides = array<i32>} : memref<16x32xf32, #tpu.memory_space<vmem>>, vector<16x32xf32>,
    return
  }
  func.func @transform_0(%arg0: i32) -> (i32, i32) {
    %c0_i32 = arith.constant 0 : i32
    %c0_i32_0 = arith.constant 0 : i32
    return %arg0, %c0_i32 : i32, i32
  }
  func.func @transform_1(%arg0: i32) -> (i32, i32) {
    %c0_i32 = arith.constant 0 : i32
    %c0_i32_0 = arith.constant 0 : i32
    %c0_i32_1 = arith.constant 0 : i32
    return %c0_i32, %c0_i32_0 : i32, i32
  }
  func.func @transform_2(%arg0: i32) -> (i32, i32) {
    %c0_i32 = arith.constant 0 : i32
    %c0_i32_0 = arith.constant 0 : i32
    %c0_i32_1 = arith.constant 0 : i32
    return %c0_i32, %c0_i32_0 : i32, i32
  }
  func.func @transform_3(%arg0: i32) -> (i32, i32) {
    %c0_i32 = arith.constant 0 : i32
    %c0_i32_0 = arith.constant 0 : i32
    %c0_i32_1 = arith.constant 0 : i32
    return %c0_i32, %c0_i32_0 : i32, i32
  }
  func.func @transform_4(%arg0: i32) -> (i32, i32) {
    %c0_i32 = arith.constant 0 : i32
    %c0_i32_0 = arith.constant 0 : i32
    %c0_i32_1 = arith.constant 0 : i32
    return %c0_i32, %c0_i32_0 : i32, i32
  }
  func.func @transform_5(%arg0: i32) -> (i32, i32) {
    %c0_i32 = arith.constant 0 : i32
    %c0_i32_0 = arith.constant 0 : i32
    %c0_i32_1 = arith.constant 0 : i32
    return %c0_i32, %c0_i32_0 : i32, i32
  }
  func.func @transform_6(%arg0: i32) -> (i32, i32) {
    %c0_i32 = arith.constant 0 : i32
    %c0_i32_0 = arith.constant 0 : i32
    %c0_i32_1 = arith.constant 0 : i32
    return %c0_i32, %c0_i32_0 : i32, i32
  }
  func.func @transform_7(%arg0: i32) -> (i32, i32) {
    %c0_i32 = arith.constant 0 : i32
    %c0_i32_0 = arith.constant 0 : i32
    return %arg0, %c0_i32 : i32, i32
  }
}

</mosaic_0001>

<llo_original>
// kernel: decoder_block_forward.8
$region0: #{decoder_block_forward.8}
  #allocation0 [shape = 'u32[]', space=smem, size = 0x4, offset = 0x4, fixed_abs, tag = 'smem constant byte address 0x4 - core index']
  #allocation1 [shape = 'u32[144,128]{1,0:T(1,128)}', space=vmem, size = 0x12000, scoped, tag = 'internal scratch']
  %s0 = inlined_call_operand.vmem [shape: f32[16,32], index: 0, kind: input, shape index: {}]
  %s1 = inlined_call_operand.vmem [shape: f32[32,96], index: 1, kind: input, shape index: {}]
  %s2 = inlined_call_operand.vmem [shape: f32[1,96], index: 2, kind: input, shape index: {}]
  %s3 = inlined_call_operand.vmem [shape: f32[16,96], index: 3, kind: output, shape index: {}]
  %s4 = sld [smem:[#allocation0]]
  $region22: #{decoder_block_forward.8} parent=0
    _
  %s6 = ssub.s32 1, %s4
  %s7 = scalar_select 0, %s6, %s4
  // Predicated region
  $region2: #{decoder_block_forward.8} parent=0 // pred_check
    _
  $region3: #{decoder_block_forward.8} parent=0 // pred_check_branch
    %9 = sbr.rel (0) target = $region5
  $region4: #{decoder_block_forward.8} parent=0 // pred_region
    _
  $region5: #{decoder_block_forward.8} parent=0 // pred_fallthru
    _
  // Predicated region
  $region6: #{decoder_block_forward.8} parent=0 // pred_check
    _
  $region7: #{decoder_block_forward.8} parent=0 // pred_check_branch
    %11 = sbr.rel (0) target = $region9
  $region8: #{decoder_block_forward.8} parent=0 // pred_region
    _
  $region9: #{decoder_block_forward.8} parent=0 // pred_fallthru
    _
  // Predicated region
  $region10: #{decoder_block_forward.8} parent=0 // pred_check
    _
  $region11: #{decoder_block_forward.8} parent=0 // pred_check_branch
    %13 = sbr.rel (0) target = $region13
  $region12: #{decoder_block_forward.8} parent=0 // pred_region
    _
  $region13: #{decoder_block_forward.8} parent=0 // pred_fallthru
    _
  %v14 = vld [vmem:[%s0] sm:$0xff]
  %v15 = vld [vmem:[%s0 + $0x8] sm:$0xff]
  %v16 = vld [vmem:[%s1] sm:$0xff]
  %v17 = vld [vmem:[%s1 + $0x8] sm:$0xff]
  %v18 = vld [vmem:[%s1 + $0x10] sm:$0xff]
  %v19 = vld [vmem:[%s1 + $0x18] sm:$0xff]
  %v20 = vld [vmem:[%s2] sm:$0x1]
  %v22 = vlaneseq
  %v23 = vshrl.u32 %v22, 7
  %v24 = vsub.s32 0, %v23
  %v25 = vrot.slane %v20, %v24
  %vm27 = vcmask 261120
  %v29 = vsel %vm27, %v14, 0
  %v32 = vsel %vm27, %v15, 0
  %34 = vmatprep.subr.mxu0 0.0
  %35 = vmatpush1.msra.mxu0 %v16
  %36 = vmatprep.subr.mxu0 0.0
  %37 = vmatpush1.msra.mxu0 %v17
  %38 = vmatprep.subr.mxu0 0.0
  %39 = vmatpush1.msra.mxu0 %v18
  %40 = vmatprep.subr.mxu0 0.0
  %41 = vmatpush1.msra.mxu0 %v19
  %42 = vmatprep.subr.mxu0 0.0
  %43 = vmatpush1.msra.mxu0 0.0
  %44 = vmatprep.subr.mxu0 0.0
  %45 = vmatpush1.msra.mxu0 0.0
  %46 = vmatprep.subr.mxu0 0.0
  %47 = vmatpush1.msra.mxu0 0.0
  %48 = vmatprep.subr.mxu0 0.0
  %49 = vmatpush1.msra.mxu0 0.0
  %50 = vmatprep.subr.mxu0 0.0
  %51 = vmatpush1.msra.mxu0 0.0
  %52 = vmatprep.subr.mxu0 0.0
  %53 = vmatpush1.msra.mxu0 0.0
  %54 = vmatprep.subr.mxu0 0.0
  %55 = vmatpush1.msra.mxu0 0.0
  %56 = vmatprep.subr.mxu0 0.0
  %57 = vmatpush1.msra.mxu0 0.0
  %58 = vmatprep.subr.mxu0 0.0
  %59 = vmatpush1.msra.mxu0 0.0
  %60 = vmatprep.subr.mxu0 0.0
  %61 = vmatpush1.msra.mxu0 0.0
  %62 = vmatprep.subr.mxu0 0.0
  %63 = vmatpush1.msra.mxu0 0.0
  %64 = vmatprep.subr.mxu0 0.0
  %65 = vmatpush1.msra.mxu0 0.0
  %66 = vmatprep.subr.mxu0 0.0
  %67 = vmatpush1.msra.mxu0 0.0
  %68 = vmatprep.subr.mxu0 0.0
  %69 = vmatpush1.msra.mxu0 0.0
  %70 = vmatprep.subr.mxu0 0.0
  %71 = vmatpush1.msra.mxu0 0.0
  %72 = vmatprep.subr.mxu0 0.0
  %73 = vmatpush1.msra.mxu0 0.0
  %74 = vmatprep.subr.mxu0 0.0
  %75 = vmatpush1.msra.mxu0 0.0
  %76 = vmatprep.subr.mxu0 0.0
  %77 = vmatpush1.msra.mxu0 0.0
  %78 = vmatprep.subr.mxu0 0.0
  %79 = vmatpush1.msra.mxu0 0.0
  %80 = vmatprep.subr.mxu0 0.0
  %81 = vmatpush1.msra.mxu0 0.0
  %82 = vmatprep.subr.mxu0 0.0
  %83 = vmatpush1.msra.mxu0 0.0
  %84 = vmatprep.subr.mxu0 0.0
  %85 = vmatpush1.msra.mxu0 0.0
  %86 = vmatprep.subr.mxu0 0.0
  %87 = vmatpush1.msra.mxu0 0.0
  %88 = vmatprep.subr.mxu0 0.0
  %89 = vmatpush1.msra.mxu0 0.0
  %90 = vmatprep.subr.mxu0 0.0
  %91 = vmatpush1.msra.mxu0 0.0
  %92 = vmatprep.subr.mxu0 0.0
  %93 = vmatpush1.msra.mxu0 0.0
  %94 = vmatprep.subr.mxu0 0.0
  %95 = vmatpush1.msra.mxu0 0.0
  %96 = vmatprep.subr.mxu0 0.0
  %97 = vmatpush1.msra.mxu0 0.0
  %98 = vmatprep.mubr.f32.mxu0 0.0
  %99 = vmatmul.mubr.f32.gmra.mrb[0].mxu0 %v29
  %v100 = vpop.f32.mrb[0].mxu0
  %v101 = vadd.f32 %v25, %v100
  %v102 = vpop.f32.mrb[0].mxu0
  %103 = vmatprep.mubr.f32.mxu0 0.0
  %104 = vmatmul.mubr.f32.gmra.mrb[0].mxu0 %v32
  %v105 = vpop.f32.mrb[0].mxu0
  %v106 = vadd.f32 %v25, %v105
  %v107 = vpop.f32.mrb[0].mxu0
  %108 = vdwg.mxu0
  %vm109 = vcmask 785408
  %110 = vst.msk [vmem:[%s3] sm:$0xff] %vm109, %v101
  %111 = vst.msk [vmem:[%s3 + $0x8] sm:$0xff] %vm109, %v106
  // Predicated region
  $region14: #{decoder_block_forward.8} parent=0 // pred_check
    _
  $region15: #{decoder_block_forward.8} parent=0 // pred_check_branch
    %113 = sbr.rel (0) target = $region17
  $region16: #{decoder_block_forward.8} parent=0 // pred_region
    _
  $region17: #{decoder_block_forward.8} parent=0 // pred_fallthru
    _
  // Predicated region
  $region18: #{decoder_block_forward.8} parent=0 // pred_check
    _
  $region19: #{decoder_block_forward.8} parent=0 // pred_check_branch
    %115 = sbr.rel (0) target = $region21
  $region20: #{decoder_block_forward.8} parent=0 // pred_region
    _
  $region21: #{decoder_block_forward.8} parent=0 // pred_fallthru
    _

// kernel: decoder_block_forward.9
$region0: #{decoder_block_forward.9}
  #allocation0 [shape = 'u32[]', space=smem, size = 0x4, offset = 0x4, fixed_abs, tag = 'smem constant byte address 0x4 - core index']
  #allocation1 [shape = 'u32[144,128]{1,0:T(1,128)}', space=vmem, size = 0x12000, scoped, tag = 'internal scratch']
  %s0 = inlined_call_operand.vmem [shape: f32[2,4,8,8], index: 0, kind: input, shape index: {}]
  %s1 = inlined_call_operand.vmem [shape: f32[2,4,8,8], index: 1, kind: input, shape index: {}]
  %s2 = inlined_call_operand.vmem [shape: f32[2,4,8,8], index: 2, kind: input, shape index: {}]
  %s3 = inlined_call_operand.vmem [shape: s32[2,1,8,8], index: 3, kind: input, shape index: {}]
  %s4 = inlined_call_operand.vmem [shape: f32[2,4,8,8], index: 4, kind: output, shape index: {}]
  %s5 = sld [smem:[#allocation0]]
  $region49: #{decoder_block_forward.9} parent=0
    _
  %s7 = ssub.s32 1, %s5
  %s8 = scalar_select 0, %s7, %s5
  loop: start=0, step=1, limit=10
  $region2: #{decoder_block_forward.9} parent=0 // loop_pre_header
    _
  $region3: #{decoder_block_forward.9} parent=0 // loop_header
    %s10 = sphi 0, %s14
    %p11 = scmp.ge.s32.totalorder %s10, 10
    %s17 = sphi 0, %s29
    %s18 = sphi 0, %s25
    %s19 = sphi 0, %s17
    %s20 = sphi 0, %s18
    %s21 = sphi 0, %s19
    %s22 = sphi 0, %s20
    %s34 = sphi 0, %s36
    %s37 = sphi 0, %s34
    %s38 = sphi 0, %s37
    %s54 = sphi 0, %s38
    %s62 = sphi 0, %s64
    %s65 = sphi 0, %s62
    %s66 = sphi 0, %s65
    %s82 = sphi 0, %s66
    %s90 = sphi 0, %s92
    %s93 = sphi 0, %s90
    %s94 = sphi 0, %s93
    %s110 = sphi 0, %s94
    %s116 = sphi 0, %s118
    %s119 = sphi 0, %s116
    %s120 = sphi 0, %s119
    %s136 = sphi 0, %s120
    %s144 = sphi 0, %s146
    %s147 = sphi 0, %s144
    %s148 = sphi 0, %s147
    %s164 = sphi 0, %s148
  $region4: #{decoder_block_forward.9} parent=0 // loop_header_branch
    %13 = sbr.rel (%p11) target = $region8
  $region5: #{decoder_block_forward.9} parent=0 // loop_body
    %s15 = ssub.s32 %s10, 1
    %s16 = ssub.s32 %s10, 2
    %s23 = sadd.s32 1, %s18
    %p24 = scmp.ge.s32.totalorder %s23, 4
    %s25 = scalar_select %p24, 0, %s23
    %s26 = sadd.s32 1, %s17
    %s27 = scalar_select %p24, %s26, %s17
    %p28 = scmp.ge.s32.totalorder %s27, 2
    %s29 = scalar_select %p28, 0, %s27
    %s30 = ssub.s32 %s17, %s29
    %s31 = ssub.s32 %s18, %s25
    %s32 = sor.u32 %s30, %s31
    %p33 = scmp.eq.s32.totalorder %s32, 0
    %s35 = sadd.s32 %s34, 1
    %s36 = scalar_select %p33, %s34, %s35
    %p39 = pneg %p33
    %p40 = scmp.eq.s32.totalorder %s10, 7
    %p41 = por %p39, %p40
    %p42 = scmp.ne.s32.totalorder %s34, %s37
    %p43 = scmp.eq.s32.totalorder %s10, 0
    %p44 = por %p42, %p43
    %p45 = scmp.ne.s32.totalorder %s34, %s37
    %p46 = scmp.eq.s32.totalorder %s15, 7
    %p47 = por %p45, %p46
    %p48 = scmp.ne.s32.totalorder %s37, %s38
    %p49 = scmp.eq.s32.totalorder %s15, 0
    %p50 = por %p48, %p49
    %p51 = scmp.ne.s32.totalorder %s37, %s38
    %p52 = scmp.eq.s32.totalorder %s16, 7
    %p53 = por %p51, %p52
    %p55 = scmp.ne.s32.totalorder %s38, %s54
    %p56 = scmp.eq.s32.totalorder %s16, 0
    %p57 = por %p55, %p56
    %s58 = ssub.s32 %s17, %s29
    %s59 = ssub.s32 %s18, %s25
    %s60 = sor.u32 %s58, %s59
    %p61 = scmp.eq.s32.totalorder %s60, 0
    %s63 = sadd.s32 %s62, 1
    %s64 = scalar_select %p61, %s62, %s63
    %p67 = pneg %p61
    %p68 = scmp.eq.s32.totalorder %s10, 7
    %p69 = por %p67, %p68
    %p70 = scmp.ne.s32.totalorder %s62, %s65
    %p71 = scmp.eq.s32.totalorder %s10, 0
    %p72 = por %p70, %p71
    %p73 = scmp.ne.s32.totalorder %s62, %s65
    %p74 = scmp.eq.s32.totalorder %s15, 7
    %p75 = por %p73, %p74
    %p76 = scmp.ne.s32.totalorder %s65, %s66
    %p77 = scmp.eq.s32.totalorder %s15, 0
    %p78 = por %p76, %p77
    %p79 = scmp.ne.s32.totalorder %s65, %s66
    %p80 = scmp.eq.s32.totalorder %s16, 7
    %p81 = por %p79, %p80
    %p83 = scmp.ne.s32.totalorder %s66, %s82
    %p84 = scmp.eq.s32.totalorder %s16, 0
    %p85 = por %p83, %p84
    %s86 = ssub.s32 %s17, %s29
    %s87 = ssub.s32 %s18, %s25
    %s88 = sor.u32 %s86, %s87
    %p89 = scmp.eq.s32.totalorder %s88, 0
    %s91 = sadd.s32 %s90, 1
    %s92 = scalar_select %p89, %s90, %s91
    %p95 = pneg %p89
    %p96 = scmp.eq.s32.totalorder %s10, 7
    %p97 = por %p95, %p96
    %p98 = scmp.ne.s32.totalorder %s90, %s93
    %p99 = scmp.eq.s32.totalorder %s10, 0
    %p100 = por %p98, %p99
    %p101 = scmp.ne.s32.totalorder %s90, %s93
    %p102 = scmp.eq.s32.totalorder %s15, 7
    %p103 = por %p101, %p102
    %p104 = scmp.ne.s32.totalorder %s93, %s94
    %p105 = scmp.eq.s32.totalorder %s15, 0
    %p106 = por %p104, %p105
    %p107 = scmp.ne.s32.totalorder %s93, %s94
    %p108 = scmp.eq.s32.totalorder %s16, 7
    %p109 = por %p107, %p108
    %p111 = scmp.ne.s32.totalorder %s94, %s110
    %p112 = scmp.eq.s32.totalorder %s16, 0
    %p113 = por %p111, %p112
    %s114 = ssub.s32 %s17, %s29
    %p115 = scmp.eq.s32.totalorder %s114, 0
    %s117 = sadd.s32 %s116, 1
    %s118 = scalar_select %p115, %s116, %s117
    %p121 = pneg %p115
    %p122 = scmp.eq.s32.totalorder %s10, 7
    %p123 = por %p121, %p122
    %p124 = scmp.ne.s32.totalorder %s116, %s119
    %p125 = scmp.eq.s32.totalorder %s10, 0
    %p126 = por %p124, %p125
    %p127 = scmp.ne.s32.totalorder %s116, %s119
    %p128 = scmp.eq.s32.totalorder %s15, 7
    %p129 = por %p127, %p128
    %p130 = scmp.ne.s32.totalorder %s119, %s120
    %p131 = scmp.eq.s32.totalorder %s15, 0
    %p132 = por %p130, %p131
    %p133 = scmp.ne.s32.totalorder %s119, %s120
    %p134 = scmp.eq.s32.totalorder %s16, 7
    %p135 = por %p133, %p134
    %p137 = scmp.ne.s32.totalorder %s120, %s136
    %p138 = scmp.eq.s32.totalorder %s16, 0
    %p139 = por %p137, %p138
    %s140 = ssub.s32 %s17, %s29
    %s141 = ssub.s32 %s18, %s25
    %s142 = sor.u32 %s140, %s141
    %p143 = scmp.eq.s32.totalorder %s142, 0
    %s145 = sadd.s32 %s144, 1
    %s146 = scalar_select %p143, %s144, %s145
    %p149 = pneg %p143
    %p150 = scmp.eq.s32.totalorder %s10, 7
    %p151 = por %p149, %p150
    %p152 = scmp.ne.s32.totalorder %s144, %s147
    %p153 = scmp.eq.s32.totalorder %s10, 0
    %p154 = por %p152, %p153
    %p155 = scmp.ne.s32.totalorder %s144, %s147
    %p156 = scmp.eq.s32.totalorder %s15, 7
    %p157 = por %p155, %p156
    %p158 = scmp.ne.s32.totalorder %s147, %s148
    %p159 = scmp.eq.s32.totalorder %s15, 0
    %p160 = por %p158, %p159
    %p161 = scmp.ne.s32.totalorder %s147, %s148
    %p162 = scmp.eq.s32.totalorder %s16, 7
    %p163 = por %p161, %p162
    %p165 = scmp.ne.s32.totalorder %s148, %s164
    %p166 = scmp.eq.s32.totalorder %s16, 0
    %p167 = por %p165, %p166
    %p168 = scmp.le.s32.totalorder 1, %s10
    %p169 = scmp.lt.s32.totalorder %s10, 9
    %p170 = pnand %p168, %p169
    %p171 = pneg %p170
    // Predicated region
    $region9: #{decoder_block_forward.9} parent=5 // pred_check
      _
    $region10: #{decoder_block_forward.9} parent=5 // pred_check_branch
      %173 = sbr.rel (%p170) target = $region12
    $region11: #{decoder_block_forward.9} parent=5 // pred_region
      %s174 = ssub.s32 %s10, 1
    $region12: #{decoder_block_forward.9} parent=5 // pred_fallthru
      _
    %p175 = scmp.lt.s32.totalorder %s10, 8
    // Predicated region
    $region13: #{decoder_block_forward.9} parent=5 // pred_check
      %p176 = pneg %p175
    $region14: #{decoder_block_forward.9} parent=5 // pred_check_branch
      %178 = sbr.rel (%p176) target = $region16
    $region15: #{decoder_block_forward.9} parent=5 // pred_region
      // Predicated region
      $region17: #{decoder_block_forward.9} parent=15 // pred_check
        %p179 = pneg %p44
      $region18: #{decoder_block_forward.9} parent=15 // pred_check_branch
        %181 = sbr.rel (%p179) target = $region20
      $region19: #{decoder_block_forward.9} parent=15 // pred_region
        %p182 = scmp.lt.s32.totalorder %s17, 1
        %s183 = scalar_select %p182, %s17, 1
        %p184 = scmp.lt.s32.totalorder %s18, 3
        %s185 = scalar_select %p184, %s18, 3
        %s186 = smul.addr %s183, 4
        %s187 = sadd.s32 %s185, %s186
        %s188 = smul.addr %s187, 8
        %s189 = scalar_lea.vmem %s0, %s188
      $region20: #{decoder_block_forward.9} parent=15 // pred_fallthru
        _
      // Predicated region
      $region21: #{decoder_block_forward.9} parent=15 // pred_check
        %p190 = pneg %p72
      $region22: #{decoder_block_forward.9} parent=15 // pred_check_branch
        %192 = sbr.rel (%p190) target = $region24
      $region23: #{decoder_block_forward.9} parent=15 // pred_region
        %p193 = scmp.lt.s32.totalorder %s17, 1
        %s194 = scalar_select %p193, %s17, 1
        %p195 = scmp.lt.s32.totalorder %s18, 3
        %s196 = scalar_select %p195, %s18, 3
        %s197 = smul.addr %s194, 4
        %s198 = sadd.s32 %s196, %s197
        %s199 = smul.addr %s198, 8
        %s200 = scalar_lea.vmem %s1, %s199
      $region24: #{decoder_block_forward.9} parent=15 // pred_fallthru
        _
      // Predicated region
      $region25: #{decoder_block_forward.9} parent=15 // pred_check
        %p201 = pneg %p100
      $region26: #{decoder_block_forward.9} parent=15 // pred_check_branch
        %203 = sbr.rel (%p201) target = $region28
      $region27: #{decoder_block_forward.9} parent=15 // pred_region
        %p204 = scmp.lt.s32.totalorder %s17, 1
        %s205 = scalar_select %p204, %s17, 1
        %p206 = scmp.lt.s32.totalorder %s18, 3
        %s207 = scalar_select %p206, %s18, 3
        %s208 = smul.addr %s205, 4
        %s209 = sadd.s32 %s207, %s208
        %s210 = smul.addr %s209, 8
        %s211 = scalar_lea.vmem %s2, %s210
      $region28: #{decoder_block_forward.9} parent=15 // pred_fallthru
        _
      // Predicated region
      $region29: #{decoder_block_forward.9} parent=15 // pred_check
        %p212 = pneg %p126
      $region30: #{decoder_block_forward.9} parent=15 // pred_check_branch
        %214 = sbr.rel (%p212) target = $region32
      $region31: #{decoder_block_forward.9} parent=15 // pred_region
        %p215 = scmp.lt.s32.totalorder %s17, 1
        %s216 = scalar_select %p215, %s17, 1
        %s217 = smul.addr %s216, 8
        %s218 = scalar_lea.vmem %s3, %s217
      $region32: #{decoder_block_forward.9} parent=15 // pred_fallthru
        _
    $region16: #{decoder_block_forward.9} parent=5 // pred_fallthru
      _
    %p219 = scmp.le.s32.totalorder 1, %s10
    %p220 = scmp.lt.s32.totalorder %s10, 9
    %p221 = pnand %p219, %p220
    %p222 = pneg %p221
    // Predicated region
    $region33: #{decoder_block_forward.9} parent=5 // pred_check
      _
    $region34: #{decoder_block_forward.9} parent=5 // pred_check_branch
      %224 = sbr.rel (%p221) target = $region36
    $region35: #{decoder_block_forward.9} parent=5 // pred_region
      %s225 = ssub.s32 %s10, 1
      %p226 = scmp.lt.s32.totalorder %s19, 1
      %s227 = scalar_select %p226, %s19, 1
      %p228 = scmp.lt.s32.totalorder %s20, 3
      %s229 = scalar_select %p228, %s20, 3
      %s230 = smul.addr %s227, 4
      %s231 = sadd.s32 %s229, %s230
      %s232 = smul.addr %s231, 8
      %s233 = scalar_lea.vmem %s0, %s232
      %p234 = pneg %p50
      %p235 = pneg %p47
      %p236 = scmp.lt.s32.totalorder %s19, 1
      %s237 = scalar_select %p236, %s19, 1
      %p238 = scmp.lt.s32.totalorder %s20, 3
      %s239 = scalar_select %p238, %s20, 3
      %s240 = smul.addr %s237, 4
      %s241 = sadd.s32 %s239, %s240
      %s242 = smul.addr %s241, 8
      %s243 = scalar_lea.vmem %s1, %s242
      %p244 = pneg %p78
      %p245 = pneg %p75
      %p246 = scmp.lt.s32.totalorder %s19, 1
      %s247 = scalar_select %p246, %s19, 1
      %p248 = scmp.lt.s32.totalorder %s20, 3
      %s249 = scalar_select %p248, %s20, 3
      %s250 = smul.addr %s247, 4
      %s251 = sadd.s32 %s249, %s250
      %s252 = smul.addr %s251, 8
      %s253 = scalar_lea.vmem %s2, %s252
      %p254 = pneg %p106
      %p255 = pneg %p103
      %p256 = scmp.lt.s32.totalorder %s19, 1
      %s257 = scalar_select %p256, %s19, 1
      %s258 = smul.addr %s257, 8
      %s259 = scalar_lea.vmem %s3, %s258
      %p260 = pneg %p132
      %p261 = pneg %p129
      %p262 = pneg %p160
      %p263 = pneg %p157
      %p264 = scmp.lt.s32.totalorder %s19, 1
      %s265 = scalar_select %p264, %s19, 1
      %p266 = scmp.lt.s32.totalorder %s20, 3
      %s267 = scalar_select %p266, %s20, 3
      %s268 = smul.addr %s265, 4
      %s269 = sadd.s32 %s267, %s268
      %s270 = smul.addr %s269, 8
      %s271 = scalar_lea.vmem %s4, %s270
      %p272 = scmp.lt.s32.totalorder %s19, 1
      %s273 = scalar_select %p272, %s19, 1
      %p274 = scmp.lt.s32.totalorder %s20, 3
      %s275 = scalar_select %p274, %s20, 3
      %s276 = smul.addr %s273, 4
      %s277 = sadd.s32 %s275, %s276
      %s278 = smul.addr %s277, 8
      %s279 = scalar_lea.vmem %s0, %s278
      %p280 = scmp.lt.s32.totalorder %s19, 1
      %s281 = scalar_select %p280, %s19, 1
      %p282 = scmp.lt.s32.totalorder %s20, 3
      %s283 = scalar_select %p282, %s20, 3
      %s284 = smul.addr %s281, 4
      %s285 = sadd.s32 %s283, %s284
      %s286 = smul.addr %s285, 8
      %s287 = scalar_lea.vmem %s1, %s286
      %p288 = scmp.lt.s32.totalorder %s19, 1
      %s289 = scalar_select %p288, %s19, 1
      %p290 = scmp.lt.s32.totalorder %s20, 3
      %s291 = scalar_select %p290, %s20, 3
      %s292 = smul.addr %s289, 4
      %s293 = sadd.s32 %s291, %s292
      %s294 = smul.addr %s293, 8
      %s295 = scalar_lea.vmem %s2, %s294
      %p296 = scmp.lt.s32.totalorder %s19, 1
      %s297 = scalar_select %p296, %s19, 1
      %s298 = smul.addr %s297, 8
      %s299 = scalar_lea.vmem %s3, %s298
      %p300 = scmp.lt.s32.totalorder %s19, 1
      %s301 = scalar_select %p300, %s19, 1
      %p302 = scmp.lt.s32.totalorder %s20, 3
      %s303 = scalar_select %p302, %s20, 3
      %s304 = smul.addr %s301, 4
      %s305 = sadd.s32 %s303, %s304
      %s306 = smul.addr %s305, 8
      %s307 = scalar_lea.vmem %s4, %s306
      %v308 = vld [vmem:[%s279] sm:$0xff]
      %v309 = vmul.f32 %v308, 0.35355338
      %v310 = vld [vmem:[%s287] sm:$0xff]
      %v311 = vld [vmem:[%s295] sm:$0xff]
      %vm312 = vcmask 64512
      %v314 = vsel %vm312, %v309, 0
      %v317 = vsel %vm312, %v310, 0
      %319 = vmatprep.subr.mxu0 0.0
      %320 = vmatpush1.xpose.msra.mxu0 %v317
      %321 = vmatprep.subr.mxu0 0.0
      %322 = vmatpush1.xpose.msra.mxu0 0.0
      %323 = vmatprep.subr.mxu0 0.0
      %324 = vmatpush1.xpose.msra.mxu0 0.0
      %325 = vmatprep.subr.mxu0 0.0
      %326 = vmatpush1.xpose.msra.mxu0 0.0
      %327 = vmatprep.subr.mxu0 0.0
      %328 = vmatpush1.xpose.msra.mxu0 0.0
      %329 = vmatprep.subr.mxu0 0.0
      %330 = vmatpush1.xpose.msra.mxu0 0.0
      %331 = vmatprep.subr.mxu0 0.0
      %332 = vmatpush1.xpose.msra.mxu0 0.0
      %333 = vmatprep.subr.mxu0 0.0
      %334 = vmatpush1.xpose.msra.mxu0 0.0
      %335 = vmatprep.subr.mxu0 0.0
      %336 = vmatpush1.xpose.msra.mxu0 0.0
      %337 = vmatprep.subr.mxu0 0.0
      %338 = vmatpush1.xpose.msra.mxu0 0.0
      %339 = vmatprep.subr.mxu0 0.0
      %340 = vmatpush1.xpose.msra.mxu0 0.0
      %341 = vmatprep.subr.mxu0 0.0
      %342 = vmatpush1.xpose.msra.mxu0 0.0
      %343 = vmatprep.subr.mxu0 0.0
      %344 = vmatpush1.xpose.msra.mxu0 0.0
      %345 = vmatprep.subr.mxu0 0.0
      %346 = vmatpush1.xpose.msra.mxu0 0.0
      %347 = vmatprep.subr.mxu0 0.0
      %348 = vmatpush1.xpose.msra.mxu0 0.0
      %349 = vmatprep.subr.mxu0 0.0
      %350 = vmatpush1.xpose.msra.mxu0 0.0
      %351 = vmatprep.subr.mxu0 0.0
      %352 = vmatpush1.xpose.msra.mxu0 0.0
      %353 = vmatprep.subr.mxu0 0.0
      %354 = vmatpush1.xpose.msra.mxu0 0.0
      %355 = vmatprep.subr.mxu0 0.0
      %356 = vmatpush1.xpose.msra.mxu0 0.0
      %357 = vmatprep.subr.mxu0 0.0
      %358 = vmatpush1.xpose.msra.mxu0 0.0
      %359 = vmatprep.subr.mxu0 0.0
      %360 = vmatpush1.xpose.msra.mxu0 0.0
      %361 = vmatprep.subr.mxu0 0.0
      %362 = vmatpush1.xpose.msra.mxu0 0.0
      %363 = vmatprep.subr.mxu0 0.0
      %364 = vmatpush1.xpose.msra.mxu0 0.0
      %365 = vmatprep.subr.mxu0 0.0
      %366 = vmatpush1.xpose.msra.mxu0 0.0
      %367 = vmatprep.subr.mxu0 0.0
      %368 = vmatpush1.xpose.msra.mxu0 0.0
      %369 = vmatprep.subr.mxu0 0.0
      %370 = vmatpush1.xpose.msra.mxu0 0.0
      %371 = vmatprep.subr.mxu0 0.0
      %372 = vmatpush1.xpose.msra.mxu0 0.0
      %373 = vmatprep.subr.mxu0 0.0
      %374 = vmatpush1.xpose.msra.mxu0 0.0
      %375 = vmatprep.subr.mxu0 0.0
      %376 = vmatpush1.xpose.msra.mxu0 0.0
      %377 = vmatprep.subr.mxu0 0.0
      %378 = vmatpush1.xpose.msra.mxu0 0.0
      %379 = vmatprep.subr.mxu0 0.0
      %380 = vmatpush1.xpose.msra.mxu0 0.0
      %381 = vmatprep.subr.mxu0 0.0
      %382 = vmatpush1.xpose.msra.mxu0 0.0
      %383 = vmatprep.mubr.f32.mxu0 0.0
      %384 = vmatmul.mubr.f32.gmra.mrb[0].mxu0 %v314
      %v385 = vpop.f32.mrb[0].mxu0
      %v386 = vadd.f32 0.0, %v385
      %v387 = vpop.f32.mrb[0].mxu0
      %388 = vdwg.mxu0
      %v389 = vld [vmem:[%s299] sm:$0xff]
      %vm390 = vcmp.eq.s32.totalorder %v389, 0
      %v391 = vsel %vm390, -1e+09, %v386
      %v392 = vsel %vm312, %v391, -inf
      %393 = vmax.xlane.f32.xlu0 %v392
      %v394 = vpop.xlane.xlu0 %393
      %v395 = vsub.f32 %v391, %v394
      %v396 = vmul.f32 %v395, 1.442695
      %v397 = vpow.pop %v396
      %v398 = vsel %vm312, %v397, 0.0
      %399 = vadd.xlane.f32.xlu0 %v398
      %v400 = vpop.xlane.xlu0 %399
      %v401 = vrcp.pop %v400
      %v402 = vmul.f32 %v397, %v401
      %v404 = vsel %vm312, %v402, 0
      %406 = vmatprep.subr.mxu0 0.0
      %407 = vmatpush1.msra.mxu0 %v311
      %408 = vmatprep.subr.mxu0 0.0
      %409 = vmatpush1.msra.mxu0 0.0
      %410 = vmatprep.subr.mxu0 0.0
      %411 = vmatpush1.msra.mxu0 0.0
      %412 = vmatprep.subr.mxu0 0.0
      %413 = vmatpush1.msra.mxu0 0.0
      %414 = vmatprep.subr.mxu0 0.0
      %415 = vmatpush1.msra.mxu0 0.0
      %416 = vmatprep.subr.mxu0 0.0
      %417 = vmatpush1.msra.mxu0 0.0
      %418 = vmatprep.subr.mxu0 0.0
      %419 = vmatpush1.msra.mxu0 0.0
      %420 = vmatprep.subr.mxu0 0.0
      %421 = vmatpush1.msra.mxu0 0.0
      %422 = vmatprep.subr.mxu0 0.0
      %423 = vmatpush1.msra.mxu0 0.0
      %424 = vmatprep.subr.mxu0 0.0
      %425 = vmatpush1.msra.mxu0 0.0
      %426 = vmatprep.subr.mxu0 0.0
      %427 = vmatpush1.msra.mxu0 0.0
      %428 = vmatprep.subr.mxu0 0.0
      %429 = vmatpush1.msra.mxu0 0.0
      %430 = vmatprep.subr.mxu0 0.0
      %431 = vmatpush1.msra.mxu0 0.0
      %432 = vmatprep.subr.mxu0 0.0
      %433 = vmatpush1.msra.mxu0 0.0
      %434 = vmatprep.subr.mxu0 0.0
      %435 = vmatpush1.msra.mxu0 0.0
      %436 = vmatprep.subr.mxu0 0.0
      %437 = vmatpush1.msra.mxu0 0.0
      %438 = vmatprep.subr.mxu0 0.0
      %439 = vmatpush1.msra.mxu0 0.0
      %440 = vmatprep.subr.mxu0 0.0
      %441 = vmatpush1.msra.mxu0 0.0
      %442 = vmatprep.subr.mxu0 0.0
      %443 = vmatpush1.msra.mxu0 0.0
      %444 = vmatprep.subr.mxu0 0.0
      %445 = vmatpush1.msra.mxu0 0.0
      %446 = vmatprep.subr.mxu0 0.0
      %447 = vmatpush1.msra.mxu0 0.0
      %448 = vmatprep.subr.mxu0 0.0
      %449 = vmatpush1.msra.mxu0 0.0
      %450 = vmatprep.subr.mxu0 0.0
      %451 = vmatpush1.msra.mxu0 0.0
      %452 = vmatprep.subr.mxu0 0.0
      %453 = vmatpush1.msra.mxu0 0.0
      %454 = vmatprep.subr.mxu0 0.0
      %455 = vmatpush1.msra.mxu0 0.0
      %456 = vmatprep.subr.mxu0 0.0
      %457 = vmatpush1.msra.mxu0 0.0
      %458 = vmatprep.subr.mxu0 0.0
      %459 = vmatpush1.msra.mxu0 0.0
      %460 = vmatprep.subr.mxu0 0.0
      %461 = vmatpush1.msra.mxu0 0.0
      %462 = vmatprep.subr.mxu0 0.0
      %463 = vmatpush1.msra.mxu0 0.0
      %464 = vmatprep.subr.mxu0 0.0
      %465 = vmatpush1.msra.mxu0 0.0
      %466 = vmatprep.subr.mxu0 0.0
      %467 = vmatpush1.msra.mxu0 0.0
      %468 = vmatprep.subr.mxu0 0.0
      %469 = vmatpush1.msra.mxu0 0.0
      %470 = vmatprep.mubr.f32.mxu0 0.0
      %471 = vmatmul.mubr.f32.gmra.mrb[0].mxu0 %v404
      %v472 = vpop.f32.mrb[0].mxu0
      %v473 = vadd.f32 0.0, %v472
      %v474 = vpop.f32.mrb[0].mxu0
      %475 = vdwg.mxu0
      %476 = vst.msk [vmem:[%s307] sm:$0xff] %vm312, %v473
      %p477 = scmp.lt.s32.totalorder %s19, 1
      %s478 = scalar_select %p477, %s19, 1
      %p479 = scmp.lt.s32.totalorder %s20, 3
      %s480 = scalar_select %p479, %s20, 3
      %s481 = smul.addr %s478, 4
      %s482 = sadd.s32 %s480, %s481
      %s483 = smul.addr %s482, 8
      %s484 = scalar_lea.vmem %s4, %s483
      // Predicated region
      $region37: #{decoder_block_forward.9} parent=35 // pred_check
        %p485 = pneg %p157
      $region38: #{decoder_block_forward.9} parent=35 // pred_check_branch
        %487 = sbr.rel (%p485) target = $region40
      $region39: #{decoder_block_forward.9} parent=35 // pred_region
        _
      $region40: #{decoder_block_forward.9} parent=35 // pred_fallthru
        _
    $region36: #{decoder_block_forward.9} parent=5 // pred_fallthru
      _
    %p488 = scmp.le.s32.totalorder 2, %s10
    // Predicated region
    $region41: #{decoder_block_forward.9} parent=5 // pred_check
      %p489 = pneg %p488
    $region42: #{decoder_block_forward.9} parent=5 // pred_check_branch
      %491 = sbr.rel (%p489) target = $region44
    $region43: #{decoder_block_forward.9} parent=5 // pred_region
      %s492 = ssub.s32 %s10, 2
      // Predicated region
      $region45: #{decoder_block_forward.9} parent=43 // pred_check
        %p493 = pneg %p163
      $region46: #{decoder_block_forward.9} parent=43 // pred_check_branch
        %495 = sbr.rel (%p493) target = $region48
      $region47: #{decoder_block_forward.9} parent=43 // pred_region
        %p496 = scmp.lt.s32.totalorder %s21, 1
        %s497 = scalar_select %p496, %s21, 1
        %p498 = scmp.lt.s32.totalorder %s22, 3
        %s499 = scalar_select %p498, %s22, 3
        %s500 = smul.addr %s497, 4
        %s501 = sadd.s32 %s499, %s500
        %s502 = smul.addr %s501, 8
        %s503 = scalar_lea.vmem %s4, %s502
      $region48: #{decoder_block_forward.9} parent=43 // pred_fallthru
        _
    $region44: #{decoder_block_forward.9} parent=5 // pred_fallthru
      _
  $region6: #{decoder_block_forward.9} parent=0 // loop_footer
    %s14 = sadd.s32 1, %s10
  $region7: #{decoder_block_forward.9} parent=0 // loop_footer_branch
    %9 = sbr.rel target = $region3
  $region8: #{decoder_block_forward.9} parent=0 // loop_exit
    _

// kernel: decoder_block_forward.10
$region0: #{decoder_block_forward.10}
  #allocation0 [shape = 'u32[]', space=smem, size = 0x4, offset = 0x4, fixed_abs, tag = 'smem constant byte address 0x4 - core index']
  #allocation1 [shape = 'u32[144,128]{1,0:T(1,128)}', space=vmem, size = 0x12000, scoped, tag = 'internal scratch']
  #allocation2 [shape = 'f32[1,1]{1,0:T(1,128)S(1)}', space=vmem, size = 0x200, scoped, tag = 'scoped memory for decoder_block_forward.10']
  #allocation3 [shape = 'f32[1,1]{1,0:T(1,128)S(1)}', space=vmem, size = 0x200, scoped, tag = 'scoped memory for decoder_block_forward.10']
  %s0 = inlined_call_operand.vmem [shape: f32[16,32], index: 0, kind: input, shape index: {}]
  %s1 = inlined_call_operand.vmem [shape: f32[32,32], index: 1, kind: input, shape index: {}]
  %s2 = inlined_call_operand.vmem [shape: f32[1,32], index: 2, kind: input, shape index: {}]
  %s3 = inlined_call_operand.vmem [shape: f32[16,32], index: 3, kind: input, shape index: {}]
  %s4 = inlined_call_operand.<no memory space> [shape: f32[1,1], index: 4, kind: input, shape index: {}]
  %s5 = inlined_call_operand.<no memory space> [shape: f32[1,1], index: 5, kind: input, shape index: {}]
  %s6 = inlined_call_operand.vmem [shape: f32[16,32], index: 6, kind: output, shape index: {}]
  %s7 = sld [smem:[#allocation0]]
  $region34: #{decoder_block_forward.10} parent=0
    _
  %s9 = ssub.s32 1, %s7
  %s10 = scalar_select 0, %s9, %s7
  %v11 = vstv %s4
  %12 = vst [vmem:[#allocation2] sm:$0x1] %v11
  %v13 = vstv %s5
  %14 = vst [vmem:[#allocation3] sm:$0x1] %v13
  // Predicated region
  $region2: #{decoder_block_forward.10} parent=0 // pred_check
    _
  $region3: #{decoder_block_forward.10} parent=0 // pred_check_branch
    %16 = sbr.rel (0) target = $region5
  $region4: #{decoder_block_forward.10} parent=0 // pred_region
    _
  $region5: #{decoder_block_forward.10} parent=0 // pred_fallthru
    _
  // Predicated region
  $region6: #{decoder_block_forward.10} parent=0 // pred_check
    _
  $region7: #{decoder_block_forward.10} parent=0 // pred_check_branch
    %18 = sbr.rel (0) target = $region9
  $region8: #{decoder_block_forward.10} parent=0 // pred_region
    _
  $region9: #{decoder_block_forward.10} parent=0 // pred_fallthru
    _
  // Predicated region
  $region10: #{decoder_block_forward.10} parent=0 // pred_check
    _
  $region11: #{decoder_block_forward.10} parent=0 // pred_check_branch
    %20 = sbr.rel (0) target = $region13
  $region12: #{decoder_block_forward.10} parent=0 // pred_region
    _
  $region13: #{decoder_block_forward.10} parent=0 // pred_fallthru
    _
  // Predicated region
  $region14: #{decoder_block_forward.10} parent=0 // pred_check
    _
  $region15: #{decoder_block_forward.10} parent=0 // pred_check_branch
    %22 = sbr.rel (0) target = $region17
  $region16: #{decoder_block_forward.10} parent=0 // pred_region
    _
  $region17: #{decoder_block_forward.10} parent=0 // pred_fallthru
    _
  // Predicated region
  $region18: #{decoder_block_forward.10} parent=0 // pred_check
    _
  $region19: #{decoder_block_forward.10} parent=0 // pred_check_branch
    %24 = sbr.rel (0) target = $region21
  $region20: #{decoder_block_forward.10} parent=0 // pred_region
    _
  $region21: #{decoder_block_forward.10} parent=0 // pred_fallthru
    _
  // Predicated region
  $region22: #{decoder_block_forward.10} parent=0 // pred_check
    _
  $region23: #{decoder_block_forward.10} parent=0 // pred_check_branch
    %26 = sbr.rel (0) target = $region25
  $region24: #{decoder_block_forward.10} parent=0 // pred_region
    _
  $region25: #{decoder_block_forward.10} parent=0 // pred_fallthru
    _
  %v27 = vld [vmem:[%s0] sm:$0xff]
  %v28 = vld [vmem:[%s0 + $0x8] sm:$0xff]
  %v29 = vld [vmem:[%s1] sm:$0xff]
  %v30 = vld [vmem:[%s1 + $0x8] sm:$0xff]
  %v31 = vld [vmem:[%s1 + $0x10] sm:$0xff]
  %v32 = vld [vmem:[%s1 + $0x18] sm:$0xff]
  %v33 = vld [vmem:[%s2] sm:$0x1]
  %v35 = vlaneseq
  %v36 = vshrl.u32 %v35, 7
  %v37 = vsub.s32 0, %v36
  %v38 = vrot.slane %v33, %v37
  %vm40 = vcmask 261120
  %v42 = vsel %vm40, %v27, 0
  %v45 = vsel %vm40, %v28, 0
  %47 = vmatprep.subr.mxu0 0.0
  %48 = vmatpush1.msra.mxu0 %v29
  %49 = vmatprep.subr.mxu0 0.0
  %50 = vmatpush1.msra.mxu0 %v30
  %51 = vmatprep.subr.mxu0 0.0
  %52 = vmatpush1.msra.mxu0 %v31
  %53 = vmatprep.subr.mxu0 0.0
  %54 = vmatpush1.msra.mxu0 %v32
  %55 = vmatprep.subr.mxu0 0.0
  %56 = vmatpush1.msra.mxu0 0.0
  %57 = vmatprep.subr.mxu0 0.0
  %58 = vmatpush1.msra.mxu0 0.0
  %59 = vmatprep.subr.mxu0 0.0
  %60 = vmatpush1.msra.mxu0 0.0
  %61 = vmatprep.subr.mxu0 0.0
  %62 = vmatpush1.msra.mxu0 0.0
  %63 = vmatprep.subr.mxu0 0.0
  %64 = vmatpush1.msra.mxu0 0.0
  %65 = vmatprep.subr.mxu0 0.0
  %66 = vmatpush1.msra.mxu0 0.0
  %67 = vmatprep.subr.mxu0 0.0
  %68 = vmatpush1.msra.mxu0 0.0
  %69 = vmatprep.subr.mxu0 0.0
  %70 = vmatpush1.msra.mxu0 0.0
  %71 = vmatprep.subr.mxu0 0.0
  %72 = vmatpush1.msra.mxu0 0.0
  %73 = vmatprep.subr.mxu0 0.0
  %74 = vmatpush1.msra.mxu0 0.0
  %75 = vmatprep.subr.mxu0 0.0
  %76 = vmatpush1.msra.mxu0 0.0
  %77 = vmatprep.subr.mxu0 0.0
  %78 = vmatpush1.msra.mxu0 0.0
  %79 = vmatprep.subr.mxu0 0.0
  %80 = vmatpush1.msra.mxu0 0.0
  %81 = vmatprep.subr.mxu0 0.0
  %82 = vmatpush1.msra.mxu0 0.0
  %83 = vmatprep.subr.mxu0 0.0
  %84 = vmatpush1.msra.mxu0 0.0
  %85 = vmatprep.subr.mxu0 0.0
  %86 = vmatpush1.msra.mxu0 0.0
  %87 = vmatprep.subr.mxu0 0.0
  %88 = vmatpush1.msra.mxu0 0.0
  %89 = vmatprep.subr.mxu0 0.0
  %90 = vmatpush1.msra.mxu0 0.0
  %91 = vmatprep.subr.mxu0 0.0
  %92 = vmatpush1.msra.mxu0 0.0
  %93 = vmatprep.subr.mxu0 0.0
  %94 = vmatpush1.msra.mxu0 0.0
  %95 = vmatprep.subr.mxu0 0.0
  %96 = vmatpush1.msra.mxu0 0.0
  %97 = vmatprep.subr.mxu0 0.0
  %98 = vmatpush1.msra.mxu0 0.0
  %99 = vmatprep.subr.mxu0 0.0
  %100 = vmatpush1.msra.mxu0 0.0
  %101 = vmatprep.subr.mxu0 0.0
  %102 = vmatpush1.msra.mxu0 0.0
  %103 = vmatprep.subr.mxu0 0.0
  %104 = vmatpush1.msra.mxu0 0.0
  %105 = vmatprep.subr.mxu0 0.0
  %106 = vmatpush1.msra.mxu0 0.0
  %107 = vmatprep.subr.mxu0 0.0
  %108 = vmatpush1.msra.mxu0 0.0
  %109 = vmatprep.subr.mxu0 0.0
  %110 = vmatpush1.msra.mxu0 0.0
  %111 = vmatprep.mubr.f32.mxu0 0.0
  %112 = vmatmul.mubr.f32.gmra.mrb[0].mxu0 %v42
  %v113 = vpop.f32.mrb[0].mxu0
  %v114 = vadd.f32 %v38, %v113
  %v115 = vpop.f32.mrb[0].mxu0
  %116 = vmatprep.mubr.f32.mxu0 0.0
  %117 = vmatmul.mubr.f32.gmra.mrb[0].mxu0 %v45
  %v118 = vpop.f32.mrb[0].mxu0
  %v119 = vadd.f32 %v38, %v118
  %v120 = vpop.f32.mrb[0].mxu0
  %121 = vdwg.mxu0
  %v122 = vld [vmem:[%s3] sm:$0xff]
  %v123 = vld [vmem:[%s3 + $0x8] sm:$0xff]
  %v124 = vadd.f32 %v122, %v114
  %v125 = vadd.f32 %v123, %v119
  %v126 = vld [vmem:[#allocation2] sm:$0x1]
  %v127 = vld [vmem:[#allocation3] sm:$0x1]
  %v128 = vsel %vm40, %v124, 0.0
  %129 = vadd.xlane.f32.xlu0 %v128
  %v130 = vpop.xlane.xlu0 %129
  %v131 = vsel %vm40, %v125, 0.0
  %132 = vadd.xlane.f32.xlu0 %v131
  %v133 = vpop.xlane.xlu0 %132
  %v134 = vrcp.pop 32.0
  %v135 = vmul.f32 %v130, %v134
  %v136 = vmul.f32 %v133, %v134
  %v137 = vsub.f32 %v124, %v135
  %v138 = vsub.f32 %v125, %v136
  %v139 = vmul.f32 %v137, %v137
  %v140 = vmul.f32 %v138, %v138
  %v141 = vsel %vm40, %v139, 0.0
  %142 = vadd.xlane.f32.xlu0 %v141
  %v143 = vpop.xlane.xlu0 %142
  %v144 = vsel %vm40, %v140, 0.0
  %145 = vadd.xlane.f32.xlu0 %v144
  %v146 = vpop.xlane.xlu0 %145
  %v147 = vmul.f32 %v143, 0.032258064
  %v148 = vmul.f32 %v146, 0.032258064
  %v149 = vrsqrt.pop %v147
  %v150 = vmul.f32 %v147, %v149
  %vm151 = vcmp.eq.f32.partialorder %v147, inf
  %v152 = vsel %vm151, %v147, %v150
  %vm153 = vcmp.eq.f32.partialorder %v147, 0.0
  %v154 = vand.u32 %v147, 2147483648
  %v155 = vsel %vm153, %v154, %v152
  %v156 = vrsqrt.pop %v148
  %v157 = vmul.f32 %v148, %v156
  %vm158 = vcmp.eq.f32.partialorder %v148, inf
  %v159 = vsel %vm158, %v148, %v157
  %vm160 = vcmp.eq.f32.partialorder %v148, 0.0
  %v161 = vand.u32 %v148, 2147483648
  %v162 = vsel %vm160, %v161, %v159
  %v164 = vlaneseq
  %v165 = vshrl.u32 %v164, 7
  %v166 = vsub.s32 0, %v165
  %v167 = vrot.slane %v126, %v166
  %168 = vset.pattern.permute.xlu0 0
  %169 = vperm.xlu0 %168, %v167
  %v170 = vpop.permute.xlu0 %169
  %v172 = vmul.f32 %v170, %v137
  %v173 = vmul.f32 %v170, %v138
  %v174 = vadd.f32 %v155, 1e-06
  %v175 = vadd.f32 %v162, 1e-06
  %v176 = vrcp.pop %v174
  %v177 = vmul.f32 %v172, %v176
  %v178 = vrcp.pop %v175
  %v179 = vmul.f32 %v173, %v178
  %v181 = vlaneseq
  %v182 = vshrl.u32 %v181, 7
  %v183 = vsub.s32 0, %v182
  %v184 = vrot.slane %v127, %v183
  %185 = vset.pattern.permute.xlu0 0
  %186 = vperm.xlu0 %185, %v184
  %v187 = vpop.permute.xlu0 %186
  %v189 = vadd.f32 %v177, %v187
  %v190 = vadd.f32 %v179, %v187
  %191 = vst.msk [vmem:[%s6] sm:$0xff] %vm40, %v189
  %192 = vst.msk [vmem:[%s6 + $0x8] sm:$0xff] %vm40, %v190
  // Predicated region
  $region26: #{decoder_block_forward.10} parent=0 // pred_check
    _
  $region27: #{decoder_block_forward.10} parent=0 // pred_check_branch
    %194 = sbr.rel (0) target = $region29
  $region28: #{decoder_block_forward.10} parent=0 // pred_region
    _
  $region29: #{decoder_block_forward.10} parent=0 // pred_fallthru
    _
  // Predicated region
  $region30: #{decoder_block_forward.10} parent=0 // pred_check
    _
  $region31: #{decoder_block_forward.10} parent=0 // pred_check_branch
    %196 = sbr.rel (0) target = $region33
  $region32: #{decoder_block_forward.10} parent=0 // pred_region
    _
  $region33: #{decoder_block_forward.10} parent=0 // pred_fallthru
    _

// kernel: decoder_block_forward.12
$region0: #{decoder_block_forward.12}
  #allocation0 [shape = 'u32[]', space=smem, size = 0x4, offset = 0x4, fixed_abs, tag = 'smem constant byte address 0x4 - core index']
  #allocation1 [shape = 'u32[144,128]{1,0:T(1,128)}', space=vmem, size = 0x12000, scoped, tag = 'internal scratch']
  %s0 = inlined_call_operand.vmem [shape: f32[16,32], index: 0, kind: input, shape index: {}]
  %s1 = inlined_call_operand.vmem [shape: f32[32,64], index: 1, kind: input, shape index: {}]
  %s2 = inlined_call_operand.vmem [shape: f32[1,64], index: 2, kind: input, shape index: {}]
  %s3 = inlined_call_operand.vmem [shape: f32[16,64], index: 3, kind: output, shape index: {}]
  %s4 = sld [smem:[#allocation0]]
  $region22: #{decoder_block_forward.12} parent=0
    _
  %s6 = ssub.s32 1, %s4
  %s7 = scalar_select 0, %s6, %s4
  // Predicated region
  $region2: #{decoder_block_forward.12} parent=0 // pred_check
    _
  $region3: #{decoder_block_forward.12} parent=0 // pred_check_branch
    %9 = sbr.rel (0) target = $region5
  $region4: #{decoder_block_forward.12} parent=0 // pred_region
    _
  $region5: #{decoder_block_forward.12} parent=0 // pred_fallthru
    _
  // Predicated region
  $region6: #{decoder_block_forward.12} parent=0 // pred_check
    _
  $region7: #{decoder_block_forward.12} parent=0 // pred_check_branch
    %11 = sbr.rel (0) target = $region9
  $region8: #{decoder_block_forward.12} parent=0 // pred_region
    _
  $region9: #{decoder_block_forward.12} parent=0 // pred_fallthru
    _
  // Predicated region
  $region10: #{decoder_block_forward.12} parent=0 // pred_check
    _
  $region11: #{decoder_block_forward.12} parent=0 // pred_check_branch
    %13 = sbr.rel (0) target = $region13
  $region12: #{decoder_block_forward.12} parent=0 // pred_region
    _
  $region13: #{decoder_block_forward.12} parent=0 // pred_fallthru
    _
  %v14 = vld [vmem:[%s0] sm:$0xff]
  %v15 = vld [vmem:[%s0 + $0x8] sm:$0xff]
  %v16 = vld [vmem:[%s1] sm:$0xff]
  %v17 = vld [vmem:[%s1 + $0x8] sm:$0xff]
  %v18 = vld [vmem:[%s1 + $0x10] sm:$0xff]
  %v19 = vld [vmem:[%s1 + $0x18] sm:$0xff]
  %v20 = vld [vmem:[%s2] sm:$0x1]
  %v22 = vlaneseq
  %v23 = vshrl.u32 %v22, 7
  %v24 = vsub.s32 0, %v23
  %v25 = vrot.slane %v20, %v24
  %vm27 = vcmask 261120
  %v29 = vsel %vm27, %v14, 0
  %v32 = vsel %vm27, %v15, 0
  %34 = vmatprep.subr.mxu0 0.0
  %35 = vmatpush1.msra.mxu0 %v16
  %36 = vmatprep.subr.mxu0 0.0
  %37 = vmatpush1.msra.mxu0 %v17
  %38 = vmatprep.subr.mxu0 0.0
  %39 = vmatpush1.msra.mxu0 %v18
  %40 = vmatprep.subr.mxu0 0.0
  %41 = vmatpush1.msra.mxu0 %v19
  %42 = vmatprep.subr.mxu0 0.0
  %43 = vmatpush1.msra.mxu0 0.0
  %44 = vmatprep.subr.mxu0 0.0
  %45 = vmatpush1.msra.mxu0 0.0
  %46 = vmatprep.subr.mxu0 0.0
  %47 = vmatpush1.msra.mxu0 0.0
  %48 = vmatprep.subr.mxu0 0.0
  %49 = vmatpush1.msra.mxu0 0.0
  %50 = vmatprep.subr.mxu0 0.0
  %51 = vmatpush1.msra.mxu0 0.0
  %52 = vmatprep.subr.mxu0 0.0
  %53 = vmatpush1.msra.mxu0 0.0
  %54 = vmatprep.subr.mxu0 0.0
  %55 = vmatpush1.msra.mxu0 0.0
  %56 = vmatprep.subr.mxu0 0.0
  %57 = vmatpush1.msra.mxu0 0.0
  %58 = vmatprep.subr.mxu0 0.0
  %59 = vmatpush1.msra.mxu0 0.0
  %60 = vmatprep.subr.mxu0 0.0
  %61 = vmatpush1.msra.mxu0 0.0
  %62 = vmatprep.subr.mxu0 0.0
  %63 = vmatpush1.msra.mxu0 0.0
  %64 = vmatprep.subr.mxu0 0.0
  %65 = vmatpush1.msra.mxu0 0.0
  %66 = vmatprep.subr.mxu0 0.0
  %67 = vmatpush1.msra.mxu0 0.0
  %68 = vmatprep.subr.mxu0 0.0
  %69 = vmatpush1.msra.mxu0 0.0
  %70 = vmatprep.subr.mxu0 0.0
  %71 = vmatpush1.msra.mxu0 0.0
  %72 = vmatprep.subr.mxu0 0.0
  %73 = vmatpush1.msra.mxu0 0.0
  %74 = vmatprep.subr.mxu0 0.0
  %75 = vmatpush1.msra.mxu0 0.0
  %76 = vmatprep.subr.mxu0 0.0
  %77 = vmatpush1.msra.mxu0 0.0
  %78 = vmatprep.subr.mxu0 0.0
  %79 = vmatpush1.msra.mxu0 0.0
  %80 = vmatprep.subr.mxu0 0.0
  %81 = vmatpush1.msra.mxu0 0.0
  %82 = vmatprep.subr.mxu0 0.0
  %83 = vmatpush1.msra.mxu0 0.0
  %84 = vmatprep.subr.mxu0 0.0
  %85 = vmatpush1.msra.mxu0 0.0
  %86 = vmatprep.subr.mxu0 0.0
  %87 = vmatpush1.msra.mxu0 0.0
  %88 = vmatprep.subr.mxu0 0.0
  %89 = vmatpush1.msra.mxu0 0.0
  %90 = vmatprep.subr.mxu0 0.0
  %91 = vmatpush1.msra.mxu0 0.0
  %92 = vmatprep.subr.mxu0 0.0
  %93 = vmatpush1.msra.mxu0 0.0
  %94 = vmatprep.subr.mxu0 0.0
  %95 = vmatpush1.msra.mxu0 0.0
  %96 = vmatprep.subr.mxu0 0.0
  %97 = vmatpush1.msra.mxu0 0.0
  %98 = vmatprep.mubr.f32.mxu0 0.0
  %99 = vmatmul.mubr.f32.gmra.mrb[0].mxu0 %v29
  %v100 = vpop.f32.mrb[0].mxu0
  %v101 = vadd.f32 %v25, %v100
  %v102 = vpop.f32.mrb[0].mxu0
  %103 = vmatprep.mubr.f32.mxu0 0.0
  %104 = vmatmul.mubr.f32.gmra.mrb[0].mxu0 %v32
  %v105 = vpop.f32.mrb[0].mxu0
  %v106 = vadd.f32 %v25, %v105
  %v107 = vpop.f32.mrb[0].mxu0
  %108 = vdwg.mxu0
  %vm109 = vcmask 523264
  %110 = vst.msk [vmem:[%s3] sm:$0xff] %vm109, %v101
  %111 = vst.msk [vmem:[%s3 + $0x8] sm:$0xff] %vm109, %v106
  // Predicated region
  $region14: #{decoder_block_forward.12} parent=0 // pred_check
    _
  $region15: #{decoder_block_forward.12} parent=0 // pred_check_branch
    %113 = sbr.rel (0) target = $region17
  $region16: #{decoder_block_forward.12} parent=0 // pred_region
    _
  $region17: #{decoder_block_forward.12} parent=0 // pred_fallthru
    _
  // Predicated region
  $region18: #{decoder_block_forward.12} parent=0 // pred_check
    _
  $region19: #{decoder_block_forward.12} parent=0 // pred_check_branch
    %115 = sbr.rel (0) target = $region21
  $region20: #{decoder_block_forward.12} parent=0 // pred_region
    _
  $region21: #{decoder_block_forward.12} parent=0 // pred_fallthru
    _

// kernel: decoder_block_forward.11
$region0: #{decoder_block_forward.11}
  #allocation0 [shape = 'u32[]', space=smem, size = 0x4, offset = 0x4, fixed_abs, tag = 'smem constant byte address 0x4 - core index']
  #allocation1 [shape = 'u32[144,128]{1,0:T(1,128)}', space=vmem, size = 0x12000, scoped, tag = 'internal scratch']
  %s0 = inlined_call_operand.vmem [shape: f32[16,32], index: 0, kind: input, shape index: {}]
  %s1 = inlined_call_operand.vmem [shape: f32[32,32], index: 1, kind: input, shape index: {}]
  %s2 = inlined_call_operand.vmem [shape: f32[1,32], index: 2, kind: input, shape index: {}]
  %s3 = inlined_call_operand.vmem [shape: f32[16,32], index: 3, kind: output, shape index: {}]
  %s4 = sld [smem:[#allocation0]]
  $region22: #{decoder_block_forward.11} parent=0
    _
  %s6 = ssub.s32 1, %s4
  %s7 = scalar_select 0, %s6, %s4
  // Predicated region
  $region2: #{decoder_block_forward.11} parent=0 // pred_check
    _
  $region3: #{decoder_block_forward.11} parent=0 // pred_check_branch
    %9 = sbr.rel (0) target = $region5
  $region4: #{decoder_block_forward.11} parent=0 // pred_region
    _
  $region5: #{decoder_block_forward.11} parent=0 // pred_fallthru
    _
  // Predicated region
  $region6: #{decoder_block_forward.11} parent=0 // pred_check
    _
  $region7: #{decoder_block_forward.11} parent=0 // pred_check_branch
    %11 = sbr.rel (0) target = $region9
  $region8: #{decoder_block_forward.11} parent=0 // pred_region
    _
  $region9: #{decoder_block_forward.11} parent=0 // pred_fallthru
    _
  // Predicated region
  $region10: #{decoder_block_forward.11} parent=0 // pred_check
    _
  $region11: #{decoder_block_forward.11} parent=0 // pred_check_branch
    %13 = sbr.rel (0) target = $region13
  $region12: #{decoder_block_forward.11} parent=0 // pred_region
    _
  $region13: #{decoder_block_forward.11} parent=0 // pred_fallthru
    _
  %v14 = vld [vmem:[%s0] sm:$0xff]
  %v15 = vld [vmem:[%s0 + $0x8] sm:$0xff]
  %v16 = vld [vmem:[%s1] sm:$0xff]
  %v17 = vld [vmem:[%s1 + $0x8] sm:$0xff]
  %v18 = vld [vmem:[%s1 + $0x10] sm:$0xff]
  %v19 = vld [vmem:[%s1 + $0x18] sm:$0xff]
  %v20 = vld [vmem:[%s2] sm:$0x1]
  %v22 = vlaneseq
  %v23 = vshrl.u32 %v22, 7
  %v24 = vsub.s32 0, %v23
  %v25 = vrot.slane %v20, %v24
  %vm27 = vcmask 261120
  %v29 = vsel %vm27, %v14, 0
  %v32 = vsel %vm27, %v15, 0
  %34 = vmatprep.subr.mxu0 0.0
  %35 = vmatpush1.msra.mxu0 %v16
  %36 = vmatprep.subr.mxu0 0.0
  %37 = vmatpush1.msra.mxu0 %v17
  %38 = vmatprep.subr.mxu0 0.0
  %39 = vmatpush1.msra.mxu0 %v18
  %40 = vmatprep.subr.mxu0 0.0
  %41 = vmatpush1.msra.mxu0 %v19
  %42 = vmatprep.subr.mxu0 0.0
  %43 = vmatpush1.msra.mxu0 0.0
  %44 = vmatprep.subr.mxu0 0.0
  %45 = vmatpush1.msra.mxu0 0.0
  %46 = vmatprep.subr.mxu0 0.0
  %47 = vmatpush1.msra.mxu0 0.0
  %48 = vmatprep.subr.mxu0 0.0
  %49 = vmatpush1.msra.mxu0 0.0
  %50 = vmatprep.subr.mxu0 0.0
  %51 = vmatpush1.msra.mxu0 0.0
  %52 = vmatprep.subr.mxu0 0.0
  %53 = vmatpush1.msra.mxu0 0.0
  %54 = vmatprep.subr.mxu0 0.0
  %55 = vmatpush1.msra.mxu0 0.0
  %56 = vmatprep.subr.mxu0 0.0
  %57 = vmatpush1.msra.mxu0 0.0
  %58 = vmatprep.subr.mxu0 0.0
  %59 = vmatpush1.msra.mxu0 0.0
  %60 = vmatprep.subr.mxu0 0.0
  %61 = vmatpush1.msra.mxu0 0.0
  %62 = vmatprep.subr.mxu0 0.0
  %63 = vmatpush1.msra.mxu0 0.0
  %64 = vmatprep.subr.mxu0 0.0
  %65 = vmatpush1.msra.mxu0 0.0
  %66 = vmatprep.subr.mxu0 0.0
  %67 = vmatpush1.msra.mxu0 0.0
  %68 = vmatprep.subr.mxu0 0.0
  %69 = vmatpush1.msra.mxu0 0.0
  %70 = vmatprep.subr.mxu0 0.0
  %71 = vmatpush1.msra.mxu0 0.0
  %72 = vmatprep.subr.mxu0 0.0
  %73 = vmatpush1.msra.mxu0 0.0
  %74 = vmatprep.subr.mxu0 0.0
  %75 = vmatpush1.msra.mxu0 0.0
  %76 = vmatprep.subr.mxu0 0.0
  %77 = vmatpush1.msra.mxu0 0.0
  %78 = vmatprep.subr.mxu0 0.0
  %79 = vmatpush1.msra.mxu0 0.0
  %80 = vmatprep.subr.mxu0 0.0
  %81 = vmatpush1.msra.mxu0 0.0
  %82 = vmatprep.subr.mxu0 0.0
  %83 = vmatpush1.msra.mxu0 0.0
  %84 = vmatprep.subr.mxu0 0.0
  %85 = vmatpush1.msra.mxu0 0.0
  %86 = vmatprep.subr.mxu0 0.0
  %87 = vmatpush1.msra.mxu0 0.0
  %88 = vmatprep.subr.mxu0 0.0
  %89 = vmatpush1.msra.mxu0 0.0
  %90 = vmatprep.subr.mxu0 0.0
  %91 = vmatpush1.msra.mxu0 0.0
  %92 = vmatprep.subr.mxu0 0.0
  %93 = vmatpush1.msra.mxu0 0.0
  %94 = vmatprep.subr.mxu0 0.0
  %95 = vmatpush1.msra.mxu0 0.0
  %96 = vmatprep.subr.mxu0 0.0
  %97 = vmatpush1.msra.mxu0 0.0
  %98 = vmatprep.mubr.f32.mxu0 0.0
  %99 = vmatmul.mubr.f32.gmra.mrb[0].mxu0 %v29
  %v100 = vpop.f32.mrb[0].mxu0
  %v101 = vadd.f32 %v25, %v100
  %v102 = vpop.f32.mrb[0].mxu0
  %103 = vmatprep.mubr.f32.mxu0 0.0
  %104 = vmatmul.mubr.f32.gmra.mrb[0].mxu0 %v32
  %v105 = vpop.f32.mrb[0].mxu0
  %v106 = vadd.f32 %v25, %v105
  %v107 = vpop.f32.mrb[0].mxu0
  %108 = vdwg.mxu0
  %109 = vst.msk [vmem:[%s3] sm:$0xff] %vm27, %v101
  %110 = vst.msk [vmem:[%s3 + $0x8] sm:$0xff] %vm27, %v106
  // Predicated region
  $region14: #{decoder_block_forward.11} parent=0 // pred_check
    _
  $region15: #{decoder_block_forward.11} parent=0 // pred_check_branch
    %112 = sbr.rel (0) target = $region17
  $region16: #{decoder_block_forward.11} parent=0 // pred_region
    _
  $region17: #{decoder_block_forward.11} parent=0 // pred_fallthru
    _
  // Predicated region
  $region18: #{decoder_block_forward.11} parent=0 // pred_check
    _
  $region19: #{decoder_block_forward.11} parent=0 // pred_check_branch
    %114 = sbr.rel (0) target = $region21
  $region20: #{decoder_block_forward.11} parent=0 // pred_region
    _
  $region21: #{decoder_block_forward.11} parent=0 // pred_fallthru
    _

// kernel: decoder_block_forward.15
$region0: #{decoder_block_forward.15}
  #allocation0 [shape = 'u32[]', space=smem, size = 0x4, offset = 0x4, fixed_abs, tag = 'smem constant byte address 0x4 - core index']
  #allocation1 [shape = 'u32[144,128]{1,0:T(1,128)}', space=vmem, size = 0x12000, scoped, tag = 'internal scratch']
  #allocation2 [shape = 'f32[1,1]{1,0:T(1,128)S(1)}', space=vmem, size = 0x200, scoped, tag = 'scoped memory for decoder_block_forward.15']
  #allocation3 [shape = 'f32[1,1]{1,0:T(1,128)S(1)}', space=vmem, size = 0x200, scoped, tag = 'scoped memory for decoder_block_forward.15']
  %s0 = inlined_call_operand.vmem [shape: f32[16,32], index: 0, kind: input, shape index: {}]
  %s1 = inlined_call_operand.vmem [shape: f32[32,64], index: 1, kind: input, shape index: {}]
  %s2 = inlined_call_operand.vmem [shape: f32[1,64], index: 2, kind: input, shape index: {}]
  %s3 = inlined_call_operand.vmem [shape: f32[64,32], index: 3, kind: input, shape index: {}]
  %s4 = inlined_call_operand.vmem [shape: f32[1,32], index: 4, kind: input, shape index: {}]
  %s5 = inlined_call_operand.<no memory space> [shape: f32[1,1], index: 5, kind: input, shape index: {}]
  %s6 = inlined_call_operand.<no memory space> [shape: f32[1,1], index: 6, kind: input, shape index: {}]
  %s7 = inlined_call_operand.hbm [shape: f32[16,32], index: 7, kind: output, shape index: {}]
  %s8 = sld [smem:[#allocation0]]
  $region38: #{decoder_block_forward.15} parent=0
    _
  %s10 = ssub.s32 1, %s8
  %s11 = scalar_select 0, %s10, %s8
  %v12 = vstv %s5
  %13 = vst [vmem:[#allocation2] sm:$0x1] %v12
  %v14 = vstv %s6
  %15 = vst [vmem:[#allocation3] sm:$0x1] %v14
  $region1: #{decoder_block_forward.15} parent=0
    #allocation4 [shape = 'u8[8192]{0}', space=vmem, size = 0x2000, scoped, tag = 'output window, operand 0, single buffered']
    #allocation5 [shape = 's32[1]{0}', space=sflag, size = 0x4, scoped, tag = 'scoped memory for decoder_block_forward.15']
    %16 = vsyncpa [#allocation5], 0
    // Predicated region
    $region2: #{decoder_block_forward.15} parent=1 // pred_check
      _
    $region3: #{decoder_block_forward.15} parent=1 // pred_check_branch
      %18 = sbr.rel (0) target = $region5
    $region4: #{decoder_block_forward.15} parent=1 // pred_region
      _
    $region5: #{decoder_block_forward.15} parent=1 // pred_fallthru
      _
    // Predicated region
    $region6: #{decoder_block_forward.15} parent=1 // pred_check
      _
    $region7: #{decoder_block_forward.15} parent=1 // pred_check_branch
      %20 = sbr.rel (0) target = $region9
    $region8: #{decoder_block_forward.15} parent=1 // pred_region
      _
    $region9: #{decoder_block_forward.15} parent=1 // pred_fallthru
      _
    // Predicated region
    $region10: #{decoder_block_forward.15} parent=1 // pred_check
      _
    $region11: #{decoder_block_forward.15} parent=1 // pred_check_branch
      %22 = sbr.rel (0) target = $region13
    $region12: #{decoder_block_forward.15} parent=1 // pred_region
      _
    $region13: #{decoder_block_forward.15} parent=1 // pred_fallthru
      _
    // Predicated region
    $region14: #{decoder_block_forward.15} parent=1 // pred_check
      _
    $region15: #{decoder_block_forward.15} parent=1 // pred_check_branch
      %24 = sbr.rel (0) target = $region17
    $region16: #{decoder_block_forward.15} parent=1 // pred_region
      _
    $region17: #{decoder_block_forward.15} parent=1 // pred_fallthru
      _
    // Predicated region
    $region18: #{decoder_block_forward.15} parent=1 // pred_check
      _
    $region19: #{decoder_block_forward.15} parent=1 // pred_check_branch
      %26 = sbr.rel (0) target = $region21
    $region20: #{decoder_block_forward.15} parent=1 // pred_region
      _
    $region21: #{decoder_block_forward.15} parent=1 // pred_fallthru
      _
    // Predicated region
    $region22: #{decoder_block_forward.15} parent=1 // pred_check
      _
    $region23: #{decoder_block_forward.15} parent=1 // pred_check_branch
      %28 = sbr.rel (0) target = $region25
    $region24: #{decoder_block_forward.15} parent=1 // pred_region
      _
    $region25: #{decoder_block_forward.15} parent=1 // pred_fallthru
      _
    // Predicated region
    $region26: #{decoder_block_forward.15} parent=1 // pred_check
      _
    $region27: #{decoder_block_forward.15} parent=1 // pred_check_branch
      %30 = sbr.rel (0) target = $region29
    $region28: #{decoder_block_forward.15} parent=1 // pred_region
      _
    $region29: #{decoder_block_forward.15} parent=1 // pred_fallthru
      _
    %v31 = vld [vmem:[%s0] sm:$0xff]
    %v32 = vld [vmem:[%s0 + $0x8] sm:$0xff]
    %v33 = vld [vmem:[%s1] sm:$0xff]
    %v34 = vld [vmem:[%s1 + $0x8] sm:$0xff]
    %v35 = vld [vmem:[%s1 + $0x10] sm:$0xff]
    %v36 = vld [vmem:[%s1 + $0x18] sm:$0xff]
    %v37 = vld [vmem:[%s2] sm:$0x1]
    %v39 = vlaneseq
    %v40 = vshrl.u32 %v39, 7
    %v41 = vsub.s32 0, %v40
    %v42 = vrot.slane %v37, %v41
    %vm44 = vcmask 261120
    %v46 = vsel %vm44, %v31, 0
    %v49 = vsel %vm44, %v32, 0
    %51 = vmatprep.subr.mxu0 0.0
    %52 = vmatpush1.msra.mxu0 %v33
    %53 = vmatprep.subr.mxu0 0.0
    %54 = vmatpush1.msra.mxu0 %v34
    %55 = vmatprep.subr.mxu0 0.0
    %56 = vmatpush1.msra.mxu0 %v35
    %57 = vmatprep.subr.mxu0 0.0
    %58 = vmatpush1.msra.mxu0 %v36
    %59 = vmatprep.subr.mxu0 0.0
    %60 = vmatpush1.msra.mxu0 0.0
    %61 = vmatprep.subr.mxu0 0.0
    %62 = vmatpush1.msra.mxu0 0.0
    %63 = vmatprep.subr.mxu0 0.0
    %64 = vmatpush1.msra.mxu0 0.0
    %65 = vmatprep.subr.mxu0 0.0
    %66 = vmatpush1.msra.mxu0 0.0
    %67 = vmatprep.subr.mxu0 0.0
    %68 = vmatpush1.msra.mxu0 0.0
    %69 = vmatprep.subr.mxu0 0.0
    %70 = vmatpush1.msra.mxu0 0.0
    %71 = vmatprep.subr.mxu0 0.0
    %72 = vmatpush1.msra.mxu0 0.0
    %73 = vmatprep.subr.mxu0 0.0
    %74 = vmatpush1.msra.mxu0 0.0
    %75 = vmatprep.subr.mxu0 0.0
    %76 = vmatpush1.msra.mxu0 0.0
    %77 = vmatprep.subr.mxu0 0.0
    %78 = vmatpush1.msra.mxu0 0.0
    %79 = vmatprep.subr.mxu0 0.0
    %80 = vmatpush1.msra.mxu0 0.0
    %81 = vmatprep.subr.mxu0 0.0
    %82 = vmatpush1.msra.mxu0 0.0
    %83 = vmatprep.subr.mxu0 0.0
    %84 = vmatpush1.msra.mxu0 0.0
    %85 = vmatprep.subr.mxu0 0.0
    %86 = vmatpush1.msra.mxu0 0.0
    %87 = vmatprep.subr.mxu0 0.0
    %88 = vmatpush1.msra.mxu0 0.0
    %89 = vmatprep.subr.mxu0 0.0
    %90 = vmatpush1.msra.mxu0 0.0
    %91 = vmatprep.subr.mxu0 0.0
    %92 = vmatpush1.msra.mxu0 0.0
    %93 = vmatprep.subr.mxu0 0.0
    %94 = vmatpush1.msra.mxu0 0.0
    %95 = vmatprep.subr.mxu0 0.0
    %96 = vmatpush1.msra.mxu0 0.0
    %97 = vmatprep.subr.mxu0 0.0
    %98 = vmatpush1.msra.mxu0 0.0
    %99 = vmatprep.subr.mxu0 0.0
    %100 = vmatpush1.msra.mxu0 0.0
    %101 = vmatprep.subr.mxu0 0.0
    %102 = vmatpush1.msra.mxu0 0.0
    %103 = vmatprep.subr.mxu0 0.0
    %104 = vmatpush1.msra.mxu0 0.0
    %105 = vmatprep.subr.mxu0 0.0
    %106 = vmatpush1.msra.mxu0 0.0
    %107 = vmatprep.subr.mxu0 0.0
    %108 = vmatpush1.msra.mxu0 0.0
    %109 = vmatprep.subr.mxu0 0.0
    %110 = vmatpush1.msra.mxu0 0.0
    %111 = vmatprep.subr.mxu0 0.0
    %112 = vmatpush1.msra.mxu0 0.0
    %113 = vmatprep.subr.mxu0 0.0
    %114 = vmatpush1.msra.mxu0 0.0
    %115 = vmatprep.mubr.f32.mxu0 0.0
    %116 = vmatmul.mubr.f32.gmra.mrb[0].mxu0 %v46
    %v117 = vpop.f32.mrb[0].mxu0
    %v118 = vadd.f32 %v42, %v117
    %v119 = vpop.f32.mrb[0].mxu0
    %120 = vmatprep.mubr.f32.mxu0 0.0
    %121 = vmatmul.mubr.f32.gmra.mrb[0].mxu0 %v49
    %v122 = vpop.f32.mrb[0].mxu0
    %v123 = vadd.f32 %v42, %v122
    %v124 = vpop.f32.mrb[0].mxu0
    %125 = vdwg.mxu0
    %v126 = vmax.f32 %v118, 0.0
    %v127 = vmax.f32 %v123, 0.0
    %v128 = vld [vmem:[%s3] sm:$0xff]
    %v129 = vld [vmem:[%s3 + $0x8] sm:$0xff]
    %v130 = vld [vmem:[%s3 + $0x10] sm:$0xff]
    %v131 = vld [vmem:[%s3 + $0x18] sm:$0xff]
    %v132 = vld [vmem:[%s3 + $0x20] sm:$0xff]
    %v133 = vld [vmem:[%s3 + $0x28] sm:$0xff]
    %v134 = vld [vmem:[%s3 + $0x30] sm:$0xff]
    %v135 = vld [vmem:[%s3 + $0x38] sm:$0xff]
    %v136 = vld [vmem:[%s4] sm:$0x1]
    %v138 = vlaneseq
    %v139 = vshrl.u32 %v138, 7
    %v140 = vsub.s32 0, %v139
    %v141 = vrot.slane %v136, %v140
    %vm143 = vcmask 523264
    %v145 = vsel %vm143, %v126, 0
    %v148 = vsel %vm143, %v127, 0
    %150 = vmatprep.subr.mxu0 0.0
    %151 = vmatpush1.msra.mxu0 %v128
    %152 = vmatprep.subr.mxu0 0.0
    %153 = vmatpush1.msra.mxu0 %v129
    %154 = vmatprep.subr.mxu0 0.0
    %155 = vmatpush1.msra.mxu0 %v130
    %156 = vmatprep.subr.mxu0 0.0
    %157 = vmatpush1.msra.mxu0 %v131
    %158 = vmatprep.subr.mxu0 0.0
    %159 = vmatpush1.msra.mxu0 %v132
    %160 = vmatprep.subr.mxu0 0.0
    %161 = vmatpush1.msra.mxu0 %v133
    %162 = vmatprep.subr.mxu0 0.0
    %163 = vmatpush1.msra.mxu0 %v134
    %164 = vmatprep.subr.mxu0 0.0
    %165 = vmatpush1.msra.mxu0 %v135
    %166 = vmatprep.subr.mxu0 0.0
    %167 = vmatpush1.msra.mxu0 0.0
    %168 = vmatprep.subr.mxu0 0.0
    %169 = vmatpush1.msra.mxu0 0.0
    %170 = vmatprep.subr.mxu0 0.0
    %171 = vmatpush1.msra.mxu0 0.0
    %172 = vmatprep.subr.mxu0 0.0
    %173 = vmatpush1.msra.mxu0 0.0
    %174 = vmatprep.subr.mxu0 0.0
    %175 = vmatpush1.msra.mxu0 0.0
    %176 = vmatprep.subr.mxu0 0.0
    %177 = vmatpush1.msra.mxu0 0.0
    %178 = vmatprep.subr.mxu0 0.0
    %179 = vmatpush1.msra.mxu0 0.0
    %180 = vmatprep.subr.mxu0 0.0
    %181 = vmatpush1.msra.mxu0 0.0
    %182 = vmatprep.subr.mxu0 0.0
    %183 = vmatpush1.msra.mxu0 0.0
    %184 = vmatprep.subr.mxu0 0.0
    %185 = vmatpush1.msra.mxu0 0.0
    %186 = vmatprep.subr.mxu0 0.0
    %187 = vmatpush1.msra.mxu0 0.0
    %188 = vmatprep.subr.mxu0 0.0
    %189 = vmatpush1.msra.mxu0 0.0
    %190 = vmatprep.subr.mxu0 0.0
    %191 = vmatpush1.msra.mxu0 0.0
    %192 = vmatprep.subr.mxu0 0.0
    %193 = vmatpush1.msra.mxu0 0.0
    %194 = vmatprep.subr.mxu0 0.0
    %195 = vmatpush1.msra.mxu0 0.0
    %196 = vmatprep.subr.mxu0 0.0
    %197 = vmatpush1.msra.mxu0 0.0
    %198 = vmatprep.subr.mxu0 0.0
    %199 = vmatpush1.msra.mxu0 0.0
    %200 = vmatprep.subr.mxu0 0.0
    %201 = vmatpush1.msra.mxu0 0.0
    %202 = vmatprep.subr.mxu0 0.0
    %203 = vmatpush1.msra.mxu0 0.0
    %204 = vmatprep.subr.mxu0 0.0
    %205 = vmatpush1.msra.mxu0 0.0
    %206 = vmatprep.subr.mxu0 0.0
    %207 = vmatpush1.msra.mxu0 0.0
    %208 = vmatprep.subr.mxu0 0.0
    %209 = vmatpush1.msra.mxu0 0.0
    %210 = vmatprep.subr.mxu0 0.0
    %211 = vmatpush1.msra.mxu0 0.0
    %212 = vmatprep.subr.mxu0 0.0
    %213 = vmatpush1.msra.mxu0 0.0
    %214 = vmatprep.mubr.f32.mxu0 0.0
    %215 = vmatmul.mubr.f32.gmra.mrb[0].mxu0 %v145
    %v216 = vpop.f32.mrb[0].mxu0
    %v217 = vadd.f32 %v141, %v216
    %v218 = vpop.f32.mrb[0].mxu0
    %219 = vmatprep.mubr.f32.mxu0 0.0
    %220 = vmatmul.mubr.f32.gmra.mrb[0].mxu0 %v148
    %v221 = vpop.f32.mrb[0].mxu0
    %v222 = vadd.f32 %v141, %v221
    %v223 = vpop.f32.mrb[0].mxu0
    %224 = vdwg.mxu0
    %v225 = vadd.f32 %v31, %v217
    %v226 = vadd.f32 %v32, %v222
    %v227 = vld [vmem:[#allocation2] sm:$0x1]
    %v228 = vld [vmem:[#allocation3] sm:$0x1]
    %v229 = vsel %vm44, %v225, 0.0
    %230 = vadd.xlane.f32.xlu0 %v229
    %v231 = vpop.xlane.xlu0 %230
    %v232 = vsel %vm44, %v226, 0.0
    %233 = vadd.xlane.f32.xlu0 %v232
    %v234 = vpop.xlane.xlu0 %233
    %v235 = vrcp.pop 32.0
    %v236 = vmul.f32 %v231, %v235
    %v237 = vmul.f32 %v234, %v235
    %v238 = vsub.f32 %v225, %v236
    %v239 = vsub.f32 %v226, %v237
    %v240 = vmul.f32 %v238, %v238
    %v241 = vmul.f32 %v239, %v239
    %v242 = vsel %vm44, %v240, 0.0
    %243 = vadd.xlane.f32.xlu0 %v242
    %v244 = vpop.xlane.xlu0 %243
    %v245 = vsel %vm44, %v241, 0.0
    %246 = vadd.xlane.f32.xlu0 %v245
    %v247 = vpop.xlane.xlu0 %246
    %v248 = vmul.f32 %v244, 0.032258064
    %v249 = vmul.f32 %v247, 0.032258064
    %v250 = vrsqrt.pop %v248
    %v251 = vmul.f32 %v248, %v250
    %vm252 = vcmp.eq.f32.partialorder %v248, inf
    %v253 = vsel %vm252, %v248, %v251
    %vm254 = vcmp.eq.f32.partialorder %v248, 0.0
    %v255 = vand.u32 %v248, 2147483648
    %v256 = vsel %vm254, %v255, %v253
    %v257 = vrsqrt.pop %v249
    %v258 = vmul.f32 %v249, %v257
    %vm259 = vcmp.eq.f32.partialorder %v249, inf
    %v260 = vsel %vm259, %v249, %v258
    %vm261 = vcmp.eq.f32.partialorder %v249, 0.0
    %v262 = vand.u32 %v249, 2147483648
    %v263 = vsel %vm261, %v262, %v260
    %v265 = vlaneseq
    %v266 = vshrl.u32 %v265, 7
    %v267 = vsub.s32 0, %v266
    %v268 = vrot.slane %v227, %v267
    %269 = vset.pattern.permute.xlu0 0
    %270 = vperm.xlu0 %269, %v268
    %v271 = vpop.permute.xlu0 %270
    %v273 = vmul.f32 %v271, %v238
    %v274 = vmul.f32 %v271, %v239
    %v275 = vadd.f32 %v256, 1e-06
    %v276 = vadd.f32 %v263, 1e-06
    %v277 = vrcp.pop %v275
    %v278 = vmul.f32 %v273, %v277
    %v279 = vrcp.pop %v276
    %v280 = vmul.f32 %v274, %v279
    %v282 = vlaneseq
    %v283 = vshrl.u32 %v282, 7
    %v284 = vsub.s32 0, %v283
    %v285 = vrot.slane %v228, %v284
    %286 = vset.pattern.permute.xlu0 0
    %287 = vperm.xlu0 %286, %v285
    %v288 = vpop.permute.xlu0 %287
    %v290 = vadd.f32 %v278, %v288
    %v291 = vadd.f32 %v280, %v288
    %292 = vst.msk [vmem:[#allocation4] sm:$0xff] %vm44, %v290
    %293 = vst.msk [vmem:[#allocation4 + $0x8] sm:$0xff] %vm44, %v291
    // Predicated region
    $region30: #{decoder_block_forward.15} parent=1 // pred_check
      _
    $region31: #{decoder_block_forward.15} parent=1 // pred_check_branch
      %295 = sbr.rel (0) target = $region33
    $region32: #{decoder_block_forward.15} parent=1 // pred_region
      %s297 = ssub.s32 256, 256
      %298 = vsyncadd [#allocation5], %s297
      %s299 = sshll.u32 [#allocation4], 4
      %s300 = int_to_ptr.vmem [resolvable:$true] %s299
      %305 = dma.vmem_to_hbm [thread:$0]  %s300, 256, %s7, [#allocation5], 128, 128, 8
    $region33: #{decoder_block_forward.15} parent=1 // pred_fallthru
      _
    // Predicated region
    $region34: #{decoder_block_forward.15} parent=1 // pred_check
      _
    $region35: #{decoder_block_forward.15} parent=1 // pred_check_branch
      %307 = sbr.rel (0) target = $region37
    $region36: #{decoder_block_forward.15} parent=1 // pred_region
      %308 = dma.done [#allocation5], 256
    $region37: #{decoder_block_forward.15} parent=1 // pred_fallthru
      _
    %309 = vsyncpa [#allocation5], 1

</llo_original>
